<compile_context>
chip_gen: v5e
topology: v5e:2x2
jax: 0.10.0
libtpu: 0.0.40
codegen_flags: <defaults>
</compile_context>

<pallas_src>
import functools

import jax
import jax.numpy as jnp
from jax.experimental import pallas as pl
from jax.experimental.pallas import tpu as pltpu


C_PAD = 128   # channel padding -> lane-dense stores & full-width MXU tiles


def _shared_cnn_kernel(num_layers, H1, W1, tile_b, tpm, *refs):
    """refs = (patches, w1, b1, w2, b2, ..., wL, bL, out).

    patches : (tile_b, H1*W1, K1)            bf16  im2col of stride-2 conv 1
    w1      : (K1, C_PAD)                    bf16  (1/255 already folded in)
    wl, l>1 : (9//tpm, tpm*C_PAD, C_PAD)     bf16  K-fused tap weights
    bl      : (1, C_PAD)                     f32
    out     : (tile_b, HL*W1, C_PAD)         f32   (trailing rows unwritten)
    """
    patches_ref = refs[0]
    out_ref = refs[-1]
    wb = refs[1:-1]
    L = num_layers
    ngroups = 9 // tpm
    K1 = patches_ref.shape[-1]

    # ---- layer 1: stride-2 conv == ONE im2col matmul (1/255 is in w1) -------
    x = patches_ref[...].reshape(tile_b * H1 * W1, K1)            # bf16
    a = jnp.dot(x, wb[0][...], preferred_element_type=jnp.float32)
    a = a.reshape(tile_b, H1 * W1, C_PAD) + wb[1][...]            # f32

    # ---- layers 2..L: ReLU then 3x3 stride-1 conv as K-fused shifted matmuls
    n_in = H1 * W1
    for l in range(2, L + 1):
        w_ref = wb[2 * (l - 1)]          # (ngroups, tpm*C_PAD, C_PAD) bf16
        b_ref = wb[2 * (l - 1) + 1]      # (1, C_PAD) f32
        h_out = H1 - 2 * (l - 1)
        n_out = h_out * W1 - 2 * (l - 1)
        # Loud failure if a shape change breaks the shifted-read invariant.
        assert n_out >= 1 and 2 * W1 + 2 + n_out <= n_in, (l, n_in, n_out)
        a16 = jnp.maximum(a, 0.0).astype(jnp.bfloat16)   # ReLU + ONE cast/layer
        acc = None
        for g in range(ngroups):
            parts = []
            for t in range(tpm):
                tap = g * tpm + t
                off = (tap // 3) * W1 + (tap % 3)
                parts.append(a16[:, off:off + n_out, :])
            lhs = parts[0] if tpm == 1 else jnp.concatenate(parts, axis=-1)
            lhs = lhs.reshape(tile_b * n_out, tpm * C_PAD)
            d = jnp.dot(lhs, w_ref[g], preferred_element_type=jnp.float32)
            acc = d if acc is None else acc + d
        a = acc.reshape(tile_b, n_out, C_PAD) + b_ref[...]
        n_in = n_out

    # ---- single contiguous lane-dense store; the trailing (HL*W1 - n_in)
    # rows of the block are garbage positions, never written, wrapper-sliced.
    out_ref[:, :n_in, :] = a.astype(out_ref.dtype)


def _pick_tile_b(B, cap=64):
    """Largest divisor of B that keeps >= 2 grid steps (v7x dual-TC) and caps
    per-step activations; at these shapes cap=64 stays far under 48 MiB VMEM."""
    limit = max(1, min(cap, B // 2 if B >= 2 else 1))
    for t in range(limit, 0, -1):
        if B % t == 0:
            return t
    return 1


def shared_cnn_forward(x, weights, biases, *, num_filters, tile_b=None,
                       taps_per_matmul=3):
    """SharedCNN forward.  x: (B, C_in, H, W) float32 pixels in [0, 255].

    weights[l]: (num_filters, C_in_l, 3, 3) float32 (PyTorch Conv2d layout)
    biases[l] : (num_filters,)              float32
    taps_per_matmul: tap fusion along K. 1 -> K=128 (v5e native),
                     3 -> K=384 (default), 9 -> K=1152 (v6e/v7x single matmul).
    Returns (B, num_filters * HL * WL) flattened in PyTorch NCHW order.
    """
    num_layers = len(weights)
    B, C_in, H, W = x.shape
    H1, W1 = (H - 3) // 2 + 1, (W - 3) // 2 + 1
    HL, WL = H1 - 2 * (num_layers - 1), W1 - 2 * (num_layers - 1)
    assert HL >= 1 and WL >= 1 and num_filters <= C_PAD
    assert taps_per_matmul in (1, 3, 9)
    if tile_b is None:
        tile_b = _pick_tile_b(B)
    assert B % tile_b == 0

    # ---- wrapper-side layout plumbing (gather/reshape only, no math) --------
    # TODO(synk): the stride-2 im2col gather still runs as XLA ops; move it
    # in-kernel with shifted loads if a profile shows it dominating at large B.
    rows = []
    for di in range(3):
        cols = [x[:, :, di:di + 2 * H1:2, dj:dj + 2 * W1:2] for dj in range(3)]
        rows.append(jnp.stack(cols, axis=-1))             # (B, C_in, H1, W1, 3)
    pat = jnp.stack(rows, axis=-2)                        # (B, C_in, H1, W1, kh, kw)
    pat = pat.transpose(0, 2, 3, 1, 4, 5)                 # (B, H1, W1, C_in, kh, kw)
    K1 = C_in * 9
    patches = pat.reshape(B, H1 * W1, K1).astype(jnp.bfloat16)  # ints: exact

    # ---- conv weights -> matmul layout, zero-padded to C_PAD channels -------
    cpad = C_PAD - num_filters
    # 1/255 folded into the layer-1 weight (scaled in f32, then bf16 cast).
    w1 = (weights[0] / 255.0).transpose(1, 2, 3, 0).reshape(K1, num_filters)
    params = [
        jnp.pad(w1, ((0, 0), (0, cpad))).astype(jnp.bfloat16),
        jnp.pad(biases[0], (0, cpad)).reshape(1, C_PAD).astype(jnp.float32),
    ]
    ngroups = 9 // taps_per_matmul
    for l in range(1, num_layers):
        w = weights[l]                                    # (C_out, C_in, 3, 3)
        ci = w.shape[1]
        taps = [jnp.pad(w[:, :, kh, kw].T, ((0, C_PAD - ci), (0, cpad)))
                for kh in range(3) for kw in range(3)]    # 9 x (C_PAD, C_PAD)
        groups = jnp.stack([
            jnp.concatenate(
                taps[g * taps_per_matmul:(g + 1) * taps_per_matmul], axis=0)
            for g in range(ngroups)])                     # (ngroups, tpm*128, 128)
        params.append(groups.astype(jnp.bfloat16))
        params.append(jnp.pad(biases[l], (0, cpad)).reshape(1, C_PAD)
                      .astype(jnp.float32))

    in_specs = [pl.BlockSpec((tile_b, H1 * W1, K1), lambda b: (b, 0, 0))]
    for p in params:   # weights/biases: full-array constant blocks, VMEM-resident
        # TODO(synk): mark these pipeline_mode=pl.Buffered(1) once single-buffered
        # constant blocks are verified to lower cleanly on the installed jax.
        in_specs.append(pl.BlockSpec(p.shape, lambda b, _nd=p.ndim: (0,) * _nd))

    kernel = functools.partial(_shared_cnn_kernel, num_layers, H1, W1, tile_b,
                               taps_per_matmul)
    out_padded = pl.pallas_call(
        kernel,
        out_shape=jax.ShapeDtypeStruct((B, HL * W1, C_PAD), jnp.float32),
        grid=(B // tile_b,),
        in_specs=in_specs,
        out_specs=pl.BlockSpec((tile_b, HL * W1, C_PAD), lambda b: (b, 0, 0)),
        compiler_params=pltpu.CompilerParams(
            dimension_semantics=("parallel",),     # shard batch over v7x's 2 TCs
            # 48 MiB: below v7x's 64 MiB physical, comfortable on v5e/v6e 128 MiB.
            vmem_limit_bytes=48 * 1024 * 1024),
    )(patches, *params)

    # Drop garbage columns / channel padding; flatten in PyTorch NCHW order.
    out = out_padded.reshape(B, HL, W1, C_PAD)[:, :, :WL, :num_filters]
    return out.transpose(0, 3, 1, 2).reshape(B, -1)       # (B, C*HL*WL)


def _reference(x, weights, biases):
    """Pure-JAX NCHW reference matching the PyTorch module."""
    y = x / 255.0
    for l, (w, b) in enumerate(zip(weights, biases)):
        if l > 0:
            y = jnp.maximum(y, 0.0)
        y = jax.lax.conv_general_dilated(
            y, w, window_strides=(2, 2) if l == 0 else (1, 1),
            padding="VALID", dimension_numbers=("NCHW", "OIHW", "NCHW"))
        y = y + b.reshape(1, -1, 1, 1)
    return y.reshape(y.shape[0], -1)


if __name__ == "__main__":
    batch, c_in, hw = 2, 4, 16
    num_layers, num_filters = 3, 32      # SharedCNN(obs_shape=(4,16,16), 3, 32)

    key = jax.random.PRNGKey(0)
    keys = jax.random.split(key, 1 + 2 * num_layers)
    # Integer-valued "pixels" in [0, 255] (exact in bf16).
    x = jnp.round(jax.random.uniform(keys[0], (batch, c_in, hw, hw)) * 255.0)

    # TODO(synk): orthogonal weight_init of the repo not reproduced; synthetic
    # deterministic normal init with matching parameter shapes.
    weights, biases = [], []
    cin = c_in
    for l in range(num_layers):
        fan_in = cin * 9
        w = jax.random.normal(keys[1 + 2 * l], (num_filters, cin, 3, 3),
                              jnp.float32) / jnp.sqrt(fan_in)
        b = 0.01 * jax.random.normal(keys[2 + 2 * l], (num_filters,), jnp.float32)
        weights.append(w)
        biases.append(b)
        cin = num_filters

    out = shared_cnn_forward(x, weights, biases, num_filters=num_filters)
    out = jax.block_until_ready(out)

    # Kernel rounds MXU inputs (weights + intermediate activations) to bf16 with
    # f32 accumulation; reference uses bf16-rounded weights and f32 activations,
    # so comparison relies on the loose RL-encoder tolerance below.
    ref = _reference(
        x, [w.astype(jnp.bfloat16).astype(jnp.float32) for w in weights], biases)
    assert out.shape == ref.shape == (batch, num_filters * 3 * 3), out.shape
    assert jnp.allclose(out, ref, atol=5e-2, rtol=5e-2), \
        float(jnp.max(jnp.abs(out - ref)))
    print("KERNEL_OK")
</pallas_src>

<mosaic_0001>
module attributes {stable_mosaic.version = 11 : i64} {
  func.func @_shared_cnn_kernel(%arg0: i32, %arg1: memref<1x49x36xbf16, #tpu.memory_space<vmem>>, %arg2: memref<36x128xbf16, #tpu.memory_space<vmem>>, %arg3: memref<1x128xf32, #tpu.memory_space<vmem>>, %arg4: memref<3x384x128xbf16, #tpu.memory_space<vmem>>, %arg5: memref<1x128xf32, #tpu.memory_space<vmem>>, %arg6: memref<3x384x128xbf16, #tpu.memory_space<vmem>>, %arg7: memref<1x128xf32, #tpu.memory_space<vmem>>, %arg8: memref<1x21x128xf32, #tpu.memory_space<vmem>>) attributes {dimension_semantics = [#tpu.dimension_semantics<parallel>], iteration_bounds = array<i64: 2>, scalar_prefetch = 0 : i64, scratch_operands = 0 : i64, tpu.core_type = #tpu.core_type<tc>, window_params = [{transform_indices = @transform_0, window_bounds = array<i64: 1, 49, 36>}, {pipeline_mode = #tpu.pipeline_mode<synchronous>, transform_indices = @transform_1, window_bounds = array<i64: 36, 128>}, {pipeline_mode = #tpu.pipeline_mode<synchronous>, transform_indices = @transform_2, window_bounds = array<i64: 1, 128>}, {pipeline_mode = #tpu.pipeline_mode<synchronous>, transform_indices = @transform_3, window_bounds = array<i64: 3, 384, 128>}, {pipeline_mode = #tpu.pipeline_mode<synchronous>, transform_indices = @transform_4, window_bounds = array<i64: 1, 128>}, {pipeline_mode = #tpu.pipeline_mode<synchronous>, transform_indices = @transform_5, window_bounds = array<i64: 3, 384, 128>}, {pipeline_mode = #tpu.pipeline_mode<synchronous>, transform_indices = @transform_6, window_bounds = array<i64: 1, 128>}, {transform_indices = @transform_7, window_bounds = array<i64: 1, 21, 128>}]} {
    %c0 = arith.constant 0 : index
    %c0_0 = arith.constant 0 : index
    %c0_1 = arith.constant 0 : index
    %0 = vector.load %arg1[%c0, %c0_0, %c0_1] : memref<1x49x36xbf16, #tpu.memory_space<vmem>>, vector<1x49x36xbf16>
    %1 = vector.shape_cast %0 : vector<1x49x36xbf16> to vector<49x36xbf16>
    %c0_2 = arith.constant 0 : index
    %c0_3 = arith.constant 0 : index
    %2 = vector.load %arg2[%c0_2, %c0_3] : memref<36x128xbf16, #tpu.memory_space<vmem>>, vector<36x128xbf16>
    %cst = arith.constant dense<0.000000e+00> : vector<49x128xf32>
    %3 = tpu.matmul %1, %2, %cst {dimension_numbers = #tpu.dot_dimension_numbers<[1], [0], [0], [1], [0, 0, 1, 1], [], []>} : vector<49x36xbf16>, vector<36x128xbf16>, vector<49x128xf32> -> vector<49x128xf32>
    %4 = vector.shape_cast %3 : vector<49x128xf32> to vector<1x49x128xf32>
    %c0_4 = arith.constant 0 : index
    %c0_5 = arith.constant 0 : index
    %5 = vector.load %arg3[%c0_4, %c0_5] : memref<1x128xf32, #tpu.memory_space<vmem>>, vector<1x128xf32>
    %6 = vector.shape_cast %5 : vector<1x128xf32> to vector<1x1x128xf32>
    %7 = vector.broadcast %6 : vector<1x1x128xf32> to vector<1x49x128xf32>
    %8 = arith.addf %4, %7 : vector<1x49x128xf32>
    %cst_6 = arith.constant 0.000000e+00 : f32
    %9 = vector.broadcast %cst_6 : f32 to vector<1x49x128xf32>
    %10 = arith.maximumf %8, %9 : vector<1x49x128xf32>
    %11 = arith.truncf %10 : vector<1x49x128xf32> to vector<1x49x128xbf16>
    %12 = vector.extract_strided_slice %11 {offsets = [0, 0, 0], sizes = [1, 33, 128], strides = [1, 1, 1]} : vector<1x49x128xbf16> to vector<1x33x128xbf16>
    %13 = vector.extract_strided_slice %11 {offsets = [0, 1, 0], sizes = [1, 33, 128], strides = [1, 1, 1]} : vector<1x49x128xbf16> to vector<1x33x128xbf16>
    %14 = vector.extract_strided_slice %11 {offsets = [0, 2, 0], sizes = [1, 33, 128], strides = [1, 1, 1]} : vector<1x49x128xbf16> to vector<1x33x128xbf16>
    %15 = tpu.concatenate %12, %13, %14 in 2 : vector<1x33x128xbf16>, vector<1x33x128xbf16>, vector<1x33x128xbf16> -> vector<1x33x384xbf16>
    %16 = vector.shape_cast %15 : vector<1x33x384xbf16> to vector<33x384xbf16>
    %c0_7 = arith.constant 0 : index
    %c0_8 = arith.constant 0 : index
    %c0_9 = arith.constant 0 : index
    %17 = vector.load %arg4[%c0_7, %c0_8, %c0_9] : memref<3x384x128xbf16, #tpu.memory_space<vmem>>, vector<1x384x128xbf16>
    %18 = vector.shape_cast %17 : vector<1x384x128xbf16> to vector<384x128xbf16>
    %cst_10 = arith.constant dense<0.000000e+00> : vector<33x128xf32>
    %19 = tpu.matmul %16, %18, %cst_10 {dimension_numbers = #tpu.dot_dimension_numbers<[1], [0], [0], [1], [0, 0, 1, 1], [], []>} : vector<33x384xbf16>, vector<384x128xbf16>, vector<33x128xf32> -> vector<33x128xf32>
    %20 = vector.extract_strided_slice %11 {offsets = [0, 7, 0], sizes = [1, 33, 128], strides = [1, 1, 1]} : vector<1x49x128xbf16> to vector<1x33x128xbf16>
    %21 = vector.extract_strided_slice %11 {offsets = [0, 8, 0], sizes = [1, 33, 128], strides = [1, 1, 1]} : vector<1x49x128xbf16> to vector<1x33x128xbf16>
    %22 = vector.extract_strided_slice %11 {offsets = [0, 9, 0], sizes = [1, 33, 128], strides = [1, 1, 1]} : vector<1x49x128xbf16> to vector<1x33x128xbf16>
    %23 = tpu.concatenate %20, %21, %22 in 2 : vector<1x33x128xbf16>, vector<1x33x128xbf16>, vector<1x33x128xbf16> -> vector<1x33x384xbf16>
    %24 = vector.shape_cast %23 : vector<1x33x384xbf16> to vector<33x384xbf16>
    %c1 = arith.constant 1 : index
    %c0_11 = arith.constant 0 : index
    %c0_12 = arith.constant 0 : index
    %25 = vector.load %arg4[%c1, %c0_11, %c0_12] : memref<3x384x128xbf16, #tpu.memory_space<vmem>>, vector<1x384x128xbf16>
    %26 = vector.shape_cast %25 : vector<1x384x128xbf16> to vector<384x128xbf16>
    %cst_13 = arith.constant dense<0.000000e+00> : vector<33x128xf32>
    %27 = tpu.matmul %24, %26, %cst_13 {dimension_numbers = #tpu.dot_dimension_numbers<[1], [0], [0], [1], [0, 0, 1, 1], [], []>} : vector<33x384xbf16>, vector<384x128xbf16>, vector<33x128xf32> -> vector<33x128xf32>
    %28 = arith.addf %19, %27 : vector<33x128xf32>
    %29 = vector.extract_strided_slice %11 {offsets = [0, 14, 0], sizes = [1, 33, 128], strides = [1, 1, 1]} : vector<1x49x128xbf16> to vector<1x33x128xbf16>
    %30 = vector.extract_strided_slice %11 {offsets = [0, 15, 0], sizes = [1, 33, 128], strides = [1, 1, 1]} : vector<1x49x128xbf16> to vector<1x33x128xbf16>
    %31 = vector.extract_strided_slice %11 {offsets = [0, 16, 0], sizes = [1, 33, 128], strides = [1, 1, 1]} : vector<1x49x128xbf16> to vector<1x33x128xbf16>
    %32 = tpu.concatenate %29, %30, %31 in 2 : vector<1x33x128xbf16>, vector<1x33x128xbf16>, vector<1x33x128xbf16> -> vector<1x33x384xbf16>
    %33 = vector.shape_cast %32 : vector<1x33x384xbf16> to vector<33x384xbf16>
    %c2 = arith.constant 2 : index
    %c0_14 = arith.constant 0 : index
    %c0_15 = arith.constant 0 : index
    %34 = vector.load %arg4[%c2, %c0_14, %c0_15] : memref<3x384x128xbf16, #tpu.memory_space<vmem>>, vector<1x384x128xbf16>
    %35 = vector.shape_cast %34 : vector<1x384x128xbf16> to vector<384x128xbf16>
    %cst_16 = arith.constant dense<0.000000e+00> : vector<33x128xf32>
    %36 = tpu.matmul %33, %35, %cst_16 {dimension_numbers = #tpu.dot_dimension_numbers<[1], [0], [0], [1], [0, 0, 1, 1], [], []>} : vector<33x384xbf16>, vector<384x128xbf16>, vector<33x128xf32> -> vector<33x128xf32>
    %37 = arith.addf %28, %36 : vector<33x128xf32>
    %38 = vector.shape_cast %37 : vector<33x128xf32> to vector<1x33x128xf32>
    %c0_17 = arith.constant 0 : index
    %c0_18 = arith.constant 0 : index
    %39 = vector.load %arg5[%c0_17, %c0_18] : memref<1x128xf32, #tpu.memory_space<vmem>>, vector<1x128xf32>
    %40 = vector.shape_cast %39 : vector<1x128xf32> to vector<1x1x128xf32>
    %41 = vector.broadcast %40 : vector<1x1x128xf32> to vector<1x33x128xf32>
    %42 = arith.addf %38, %41 : vector<1x33x128xf32>
    %cst_19 = arith.constant 0.000000e+00 : f32
    %43 = vector.broadcast %cst_19 : f32 to vector<1x33x128xf32>
    %44 = arith.maximumf %42, %43 : vector<1x33x128xf32>
    %45 = arith.truncf %44 : vector<1x33x128xf32> to vector<1x33x128xbf16>
    %46 = vector.extract_strided_slice %45 {offsets = [0, 0, 0], sizes = [1, 17, 128], strides = [1, 1, 1]} : vector<1x33x128xbf16> to vector<1x17x128xbf16>
    %47 = vector.extract_strided_slice %45 {offsets = [0, 1, 0], sizes = [1, 17, 128], strides = [1, 1, 1]} : vector<1x33x128xbf16> to vector<1x17x128xbf16>
    %48 = vector.extract_strided_slice %45 {offsets = [0, 2, 0], sizes = [1, 17, 128], strides = [1, 1, 1]} : vector<1x33x128xbf16> to vector<1x17x128xbf16>
    %49 = tpu.concatenate %46, %47, %48 in 2 : vector<1x17x128xbf16>, vector<1x17x128xbf16>, vector<1x17x128xbf16> -> vector<1x17x384xbf16>
    %50 = vector.shape_cast %49 : vector<1x17x384xbf16> to vector<17x384xbf16>
    %c0_20 = arith.constant 0 : index
    %c0_21 = arith.constant 0 : index
    %c0_22 = arith.constant 0 : index
    %51 = vector.load %arg6[%c0_20, %c0_21, %c0_22] : memref<3x384x128xbf16, #tpu.memory_space<vmem>>, vector<1x384x128xbf16>
    %52 = vector.shape_cast %51 : vector<1x384x128xbf16> to vector<384x128xbf16>
    %cst_23 = arith.constant dense<0.000000e+00> : vector<17x128xf32>
    %53 = tpu.matmul %50, %52, %cst_23 {dimension_numbers = #tpu.dot_dimension_numbers<[1], [0], [0], [1], [0, 0, 1, 1], [], []>} : vector<17x384xbf16>, vector<384x128xbf16>, vector<17x128xf32> -> vector<17x128xf32>
    %54 = vector.extract_strided_slice %45 {offsets = [0, 7, 0], sizes = [1, 17, 128], strides = [1, 1, 1]} : vector<1x33x128xbf16> to vector<1x17x128xbf16>
    %55 = vector.extract_strided_slice %45 {offsets = [0, 8, 0], sizes = [1, 17, 128], strides = [1, 1, 1]} : vector<1x33x128xbf16> to vector<1x17x128xbf16>
    %56 = vector.extract_strided_slice %45 {offsets = [0, 9, 0], sizes = [1, 17, 128], strides = [1, 1, 1]} : vector<1x33x128xbf16> to vector<1x17x128xbf16>
    %57 = tpu.concatenate %54, %55, %56 in 2 : vector<1x17x128xbf16>, vector<1x17x128xbf16>, vector<1x17x128xbf16> -> vector<1x17x384xbf16>
    %58 = vector.shape_cast %57 : vector<1x17x384xbf16> to vector<17x384xbf16>
    %c1_24 = arith.constant 1 : index
    %c0_25 = arith.constant 0 : index
    %c0_26 = arith.constant 0 : index
    %59 = vector.load %arg6[%c1_24, %c0_25, %c0_26] : memref<3x384x128xbf16, #tpu.memory_space<vmem>>, vector<1x384x128xbf16>
    %60 = vector.shape_cast %59 : vector<1x384x128xbf16> to vector<384x128xbf16>
    %cst_27 = arith.constant dense<0.000000e+00> : vector<17x128xf32>
    %61 = tpu.matmul %58, %60, %cst_27 {dimension_numbers = #tpu.dot_dimension_numbers<[1], [0], [0], [1], [0, 0, 1, 1], [], []>} : vector<17x384xbf16>, vector<384x128xbf16>, vector<17x128xf32> -> vector<17x128xf32>
    %62 = arith.addf %53, %61 : vector<17x128xf32>
    %63 = vector.extract_strided_slice %45 {offsets = [0, 14, 0], sizes = [1, 17, 128], strides = [1, 1, 1]} : vector<1x33x128xbf16> to vector<1x17x128xbf16>
    %64 = vector.extract_strided_slice %45 {offsets = [0, 15, 0], sizes = [1, 17, 128], strides = [1, 1, 1]} : vector<1x33x128xbf16> to vector<1x17x128xbf16>
    %65 = vector.extract_strided_slice %45 {offsets = [0, 16, 0], sizes = [1, 17, 128], strides = [1, 1, 1]} : vector<1x33x128xbf16> to vector<1x17x128xbf16>
    %66 = tpu.concatenate %63, %64, %65 in 2 : vector<1x17x128xbf16>, vector<1x17x128xbf16>, vector<1x17x128xbf16> -> vector<1x17x384xbf16>
    %67 = vector.shape_cast %66 : vector<1x17x384xbf16> to vector<17x384xbf16>
    %c2_28 = arith.constant 2 : index
    %c0_29 = arith.constant 0 : index
    %c0_30 = arith.constant 0 : index
    %68 = vector.load %arg6[%c2_28, %c0_29, %c0_30] : memref<3x384x128xbf16, #tpu.memory_space<vmem>>, vector<1x384x128xbf16>
    %69 = vector.shape_cast %68 : vector<1x384x128xbf16> to vector<384x128xbf16>
    %cst_31 = arith.constant dense<0.000000e+00> : vector<17x128xf32>
    %70 = tpu.matmul %67, %69, %cst_31 {dimension_numbers = #tpu.dot_dimension_numbers<[1], [0], [0], [1], [0, 0, 1, 1], [], []>} : vector<17x384xbf16>, vector<384x128xbf16>, vector<17x128xf32> -> vector<17x128xf32>
    %71 = arith.addf %62, %70 : vector<17x128xf32>
    %72 = vector.shape_cast %71 : vector<17x128xf32> to vector<1x17x128xf32>
    %c0_32 = arith.constant 0 : index
    %c0_33 = arith.constant 0 : index
    %73 = vector.load %arg7[%c0_32, %c0_33] : memref<1x128xf32, #tpu.memory_space<vmem>>, vector<1x128xf32>
    %74 = vector.shape_cast %73 : vector<1x128xf32> to vector<1x1x128xf32>
    %75 = vector.broadcast %74 : vector<1x1x128xf32> to vector<1x17x128xf32>
    %76 = arith.addf %72, %75 : vector<1x17x128xf32>
    %c0_34 = arith.constant 0 : index
    %c0_35 = arith.constant 0 : index
    %c0_36 = arith.constant 0 : index
    %77 = vector.load %arg8[%c0_34, %c0_35, %c0_36] : memref<1x21x128xf32, #tpu.memory_space<vmem>>, vector<1x17x128xf32>
    tpu.vector_store %arg8[%c0_34, %c0_35, %c0_36], %76 {strides = array<i32>} : memref<1x21x128xf32, #tpu.memory_space<vmem>>, vector<1x17x128xf32>,
    return
  }
  func.func @transform_0(%arg0: i32) -> (i32, i32, i32) {
    %c0_i32 = arith.constant 0 : i32
    %c0_i32_0 = arith.constant 0 : i32
    %c0_i32_1 = arith.constant 0 : i32
    return %arg0, %c0_i32, %c0_i32_0 : i32, i32, i32
  }
  func.func @transform_1(%arg0: i32) -> (i32, i32) {
    %c0_i32 = arith.constant 0 : i32
    %c0_i32_0 = arith.constant 0 : i32
    %c0_i32_1 = arith.constant 0 : i32
    return %c0_i32, %c0_i32_0 : i32, i32
  }
  func.func @transform_2(%arg0: i32) -> (i32, i32) {
    %c0_i32 = arith.constant 0 : i32
    %c0_i32_0 = arith.constant 0 : i32
    %c0_i32_1 = arith.constant 0 : i32
    return %c0_i32, %c0_i32_0 : i32, i32
  }
  func.func @transform_3(%arg0: i32) -> (i32, i32, i32) {
    %c0_i32 = arith.constant 0 : i32
    %c0_i32_0 = arith.constant 0 : i32
    %c0_i32_1 = arith.constant 0 : i32
    %c0_i32_2 = arith.constant 0 : i32
    return %c0_i32, %c0_i32_0, %c0_i32_1 : i32, i32, i32
  }
  func.func @transform_4(%arg0: i32) -> (i32, i32) {
    %c0_i32 = arith.constant 0 : i32
    %c0_i32_0 = arith.constant 0 : i32
    %c0_i32_1 = arith.constant 0 : i32
    return %c0_i32, %c0_i32_0 : i32, i32
  }
  func.func @transform_5(%arg0: i32) -> (i32, i32, i32) {
    %c0_i32 = arith.constant 0 : i32
    %c0_i32_0 = arith.constant 0 : i32
    %c0_i32_1 = arith.constant 0 : i32
    %c0_i32_2 = arith.constant 0 : i32
    return %c0_i32, %c0_i32_0, %c0_i32_1 : i32, i32, i32
  }
  func.func @transform_6(%arg0: i32) -> (i32, i32) {
    %c0_i32 = arith.constant 0 : i32
    %c0_i32_0 = arith.constant 0 : i32
    %c0_i32_1 = arith.constant 0 : i32
    return %c0_i32, %c0_i32_0 : i32, i32
  }
  func.func @transform_7(%arg0: i32) -> (i32, i32, i32) {
    %c0_i32 = arith.constant 0 : i32
    %c0_i32_0 = arith.constant 0 : i32
    %c0_i32_1 = arith.constant 0 : i32
    return %arg0, %c0_i32, %c0_i32_0 : i32, i32, i32
  }
}

</mosaic_0001>

<llo_original>
// kernel: tpu_custom_call.1
$region0: #{tpu_custom_call.1}
  #allocation0 [shape = 'u32[]', space=smem, size = 0x4, offset = 0x4, fixed_abs, tag = 'smem constant byte address 0x4 - core index']
  #allocation1 [shape = 'u32[72,128]{1,0:T(1,128)}', space=vmem, size = 0x9000, scoped, tag = 'internal scratch']
  %s0 = inlined_call_operand.vmem [shape: bf16[2,49,36], index: 0, kind: input, shape index: {}]
  %s1 = inlined_call_operand.vmem [shape: bf16[36,128], index: 1, kind: input, shape index: {}]
  %s2 = inlined_call_operand.vmem [shape: f32[1,128], index: 2, kind: input, shape index: {}]
  %s3 = inlined_call_operand.hbm [shape: bf16[3,384,128], index: 3, kind: input, shape index: {}]
  %s4 = inlined_call_operand.vmem [shape: f32[1,128], index: 4, kind: input, shape index: {}]
  %s5 = inlined_call_operand.hbm [shape: bf16[3,384,128], index: 5, kind: input, shape index: {}]
  %s6 = inlined_call_operand.vmem [shape: f32[1,128], index: 6, kind: input, shape index: {}]
  %s7 = inlined_call_operand.vmem [shape: f32[2,21,128], index: 7, kind: output, shape index: {}]
  %s8 = sld [smem:[#allocation0]]
  $region69: #{tpu_custom_call.1} parent=0
    _
  %s10 = ssub.s32 1, %s8
  %s11 = scalar_select 0, %s10, %s8
  $region1: #{tpu_custom_call.1} parent=0
    #allocation2 [shape = 'u8[294912]{0}', space=vmem, size = 0x48000, scoped, tag = 'input window, operand 3, single buffered']
    #allocation3 [shape = 's32[2]{0}', space=sflag, size = 0x8, scoped, tag = 'scoped memory for tpu_custom_call.1']
    #allocation4 [shape = 'u8[294912]{0}', space=vmem, size = 0x48000, scoped, tag = 'input window, operand 5, single buffered']
    #allocation5 [shape = 's32[1]{0}', space=sflag, size = 0x4, scoped, tag = 'scoped memory for tpu_custom_call.1']
    %12 = vsyncpa [#allocation3], 0
    %13 = vsyncpa [#allocation5], 0
    loop: start=0, step=1, limit=4
    $region2: #{tpu_custom_call.1} parent=1 // loop_pre_header
      _
    $region3: #{tpu_custom_call.1} parent=1 // loop_header
      %s15 = sphi 0, %s19
      %p16 = scmp.ge.s32.totalorder %s15, 4
      %s25 = sphi 0, %s27
      %s28 = sphi 0, %s25
      %s29 = sphi 0, %s28
      %s45 = sphi 0, %s29
      %s49 = sphi 0, %s49
      %s51 = sphi 0, %s49
      %s52 = sphi 0, %s51
      %s66 = sphi 0, %s52
      %s70 = sphi 0, %s70
      %s72 = sphi 0, %s70
      %s73 = sphi 0, %s72
      %s87 = sphi 0, %s73
      %s91 = sphi 0, %s91
      %s93 = sphi 0, %s91
      %s94 = sphi 0, %s93
      %s108 = sphi 0, %s94
      %s112 = sphi 0, %s112
      %s114 = sphi 0, %s112
      %s115 = sphi 0, %s114
      %s129 = sphi 0, %s115
      %s133 = sphi 0, %s133
      %s135 = sphi 0, %s133
      %s136 = sphi 0, %s135
      %s150 = sphi 0, %s136
      %s154 = sphi 0, %s154
      %s156 = sphi 0, %s154
      %s157 = sphi 0, %s156
      %s171 = sphi 0, %s157
      %s177 = sphi 0, %s179
      %s180 = sphi 0, %s177
      %s181 = sphi 0, %s180
      %s197 = sphi 0, %s181
    $region4: #{tpu_custom_call.1} parent=1 // loop_header_branch
      %18 = sbr.rel (%p16) target = $region8
    $region5: #{tpu_custom_call.1} parent=1 // loop_body
      %s20 = ssub.s32 %s15, 1
      %s21 = ssub.s32 %s15, 2
      %s22 = sadd.s32 %s15, 1
      %s23 = ssub.s32 %s15, %s22
      %p24 = scmp.eq.s32.totalorder %s23, 0
      %s26 = sadd.s32 %s25, 1
      %s27 = scalar_select %p24, %s25, %s26
      %p30 = pneg %p24
      %p31 = scmp.eq.s32.totalorder %s15, 1
      %p32 = por %p30, %p31
      %p33 = scmp.ne.s32.totalorder %s25, %s28
      %p34 = scmp.eq.s32.totalorder %s15, 0
      %p35 = por %p33, %p34
      %p36 = scmp.ne.s32.totalorder %s25, %s28
      %p37 = scmp.eq.s32.totalorder %s20, 1
      %p38 = por %p36, %p37
      %p39 = scmp.ne.s32.totalorder %s28, %s29
      %p40 = scmp.eq.s32.totalorder %s20, 0
      %p41 = por %p39, %p40
      %p42 = scmp.ne.s32.totalorder %s28, %s29
      %p43 = scmp.eq.s32.totalorder %s21, 1
      %p44 = por %p42, %p43
      %p46 = scmp.ne.s32.totalorder %s29, %s45
      %p47 = scmp.eq.s32.totalorder %s21, 0
      %p48 = por %p46, %p47
      %s50 = sadd.s32 %s49, 1
      %p53 = scmp.eq.s32.totalorder %s15, 1
      %p54 = scmp.ne.s32.totalorder %s49, %s51
      %p55 = scmp.eq.s32.totalorder %s15, 0
      %p56 = por %p54, %p55
      %p57 = scmp.ne.s32.totalorder %s49, %s51
      %p58 = scmp.eq.s32.totalorder %s20, 1
      %p59 = por %p57, %p58
      %p60 = scmp.ne.s32.totalorder %s51, %s52
      %p61 = scmp.eq.s32.totalorder %s20, 0
      %p62 = por %p60, %p61
      %p63 = scmp.ne.s32.totalorder %s51, %s52
      %p64 = scmp.eq.s32.totalorder %s21, 1
      %p65 = por %p63, %p64
      %p67 = scmp.ne.s32.totalorder %s52, %s66
      %p68 = scmp.eq.s32.totalorder %s21, 0
      %p69 = por %p67, %p68
      %s71 = sadd.s32 %s70, 1
      %p74 = scmp.eq.s32.totalorder %s15, 1
      %p75 = scmp.ne.s32.totalorder %s70, %s72
      %p76 = scmp.eq.s32.totalorder %s15, 0
      %p77 = por %p75, %p76
      %p78 = scmp.ne.s32.totalorder %s70, %s72
      %p79 = scmp.eq.s32.totalorder %s20, 1
      %p80 = por %p78, %p79
      %p81 = scmp.ne.s32.totalorder %s72, %s73
      %p82 = scmp.eq.s32.totalorder %s20, 0
      %p83 = por %p81, %p82
      %p84 = scmp.ne.s32.totalorder %s72, %s73
      %p85 = scmp.eq.s32.totalorder %s21, 1
      %p86 = por %p84, %p85
      %p88 = scmp.ne.s32.totalorder %s73, %s87
      %p89 = scmp.eq.s32.totalorder %s21, 0
      %p90 = por %p88, %p89
      %s92 = sadd.s32 %s91, 1
      %p95 = scmp.eq.s32.totalorder %s15, 1
      %p96 = scmp.ne.s32.totalorder %s91, %s93
      %p97 = scmp.eq.s32.totalorder %s15, 0
      %p98 = por %p96, %p97
      %p99 = scmp.ne.s32.totalorder %s91, %s93
      %p100 = scmp.eq.s32.totalorder %s20, 1
      %p101 = por %p99, %p100
      %p102 = scmp.ne.s32.totalorder %s93, %s94
      %p103 = scmp.eq.s32.totalorder %s20, 0
      %p104 = por %p102, %p103
      %p105 = scmp.ne.s32.totalorder %s93, %s94
      %p106 = scmp.eq.s32.totalorder %s21, 1
      %p107 = por %p105, %p106
      %p109 = scmp.ne.s32.totalorder %s94, %s108
      %p110 = scmp.eq.s32.totalorder %s21, 0
      %p111 = por %p109, %p110
      %s113 = sadd.s32 %s112, 1
      %p116 = scmp.eq.s32.totalorder %s15, 1
      %p117 = scmp.ne.s32.totalorder %s112, %s114
      %p118 = scmp.eq.s32.totalorder %s15, 0
      %p119 = por %p117, %p118
      %p120 = scmp.ne.s32.totalorder %s112, %s114
      %p121 = scmp.eq.s32.totalorder %s20, 1
      %p122 = por %p120, %p121
      %p123 = scmp.ne.s32.totalorder %s114, %s115
      %p124 = scmp.eq.s32.totalorder %s20, 0
      %p125 = por %p123, %p124
      %p126 = scmp.ne.s32.totalorder %s114, %s115
      %p127 = scmp.eq.s32.totalorder %s21, 1
      %p128 = por %p126, %p127
      %p130 = scmp.ne.s32.totalorder %s115, %s129
      %p131 = scmp.eq.s32.totalorder %s21, 0
      %p132 = por %p130, %p131
      %s134 = sadd.s32 %s133, 1
      %p137 = scmp.eq.s32.totalorder %s15, 1
      %p138 = scmp.ne.s32.totalorder %s133, %s135
      %p139 = scmp.eq.s32.totalorder %s15, 0
      %p140 = por %p138, %p139
      %p141 = scmp.ne.s32.totalorder %s133, %s135
      %p142 = scmp.eq.s32.totalorder %s20, 1
      %p143 = por %p141, %p142
      %p144 = scmp.ne.s32.totalorder %s135, %s136
      %p145 = scmp.eq.s32.totalorder %s20, 0
      %p146 = por %p144, %p145
      %p147 = scmp.ne.s32.totalorder %s135, %s136
      %p148 = scmp.eq.s32.totalorder %s21, 1
      %p149 = por %p147, %p148
      %p151 = scmp.ne.s32.totalorder %s136, %s150
      %p152 = scmp.eq.s32.totalorder %s21, 0
      %p153 = por %p151, %p152
      %s155 = sadd.s32 %s154, 1
      %p158 = scmp.eq.s32.totalorder %s15, 1
      %p159 = scmp.ne.s32.totalorder %s154, %s156
      %p160 = scmp.eq.s32.totalorder %s15, 0
      %p161 = por %p159, %p160
      %p162 = scmp.ne.s32.totalorder %s154, %s156
      %p163 = scmp.eq.s32.totalorder %s20, 1
      %p164 = por %p162, %p163
      %p165 = scmp.ne.s32.totalorder %s156, %s157
      %p166 = scmp.eq.s32.totalorder %s20, 0
      %p167 = por %p165, %p166
      %p168 = scmp.ne.s32.totalorder %s156, %s157
      %p169 = scmp.eq.s32.totalorder %s21, 1
      %p170 = por %p168, %p169
      %p172 = scmp.ne.s32.totalorder %s157, %s171
      %p173 = scmp.eq.s32.totalorder %s21, 0
      %p174 = por %p172, %p173
      %s175 = ssub.s32 %s15, %s22
      %p176 = scmp.eq.s32.totalorder %s175, 0
      %s178 = sadd.s32 %s177, 1
      %s179 = scalar_select %p176, %s177, %s178
      %p182 = pneg %p176
      %p183 = scmp.eq.s32.totalorder %s15, 1
      %p184 = por %p182, %p183
      %p185 = scmp.ne.s32.totalorder %s177, %s180
      %p186 = scmp.eq.s32.totalorder %s15, 0
      %p187 = por %p185, %p186
      %p188 = scmp.ne.s32.totalorder %s177, %s180
      %p189 = scmp.eq.s32.totalorder %s20, 1
      %p190 = por %p188, %p189
      %p191 = scmp.ne.s32.totalorder %s180, %s181
      %p192 = scmp.eq.s32.totalorder %s20, 0
      %p193 = por %p191, %p192
      %p194 = scmp.ne.s32.totalorder %s180, %s181
      %p195 = scmp.eq.s32.totalorder %s21, 1
      %p196 = por %p194, %p195
      %p198 = scmp.ne.s32.totalorder %s181, %s197
      %p199 = scmp.eq.s32.totalorder %s21, 0
      %p200 = por %p198, %p199
      %p201 = scmp.le.s32.totalorder 1, %s15
      %p202 = scmp.lt.s32.totalorder %s15, 3
      %p203 = pnand %p201, %p202
      %p204 = pneg %p203
      // Predicated region
      $region9: #{tpu_custom_call.1} parent=5 // pred_check
        _
      $region10: #{tpu_custom_call.1} parent=5 // pred_check_branch
        %206 = sbr.rel (%p203) target = $region12
      $region11: #{tpu_custom_call.1} parent=5 // pred_region
        %s207 = ssub.s32 %s15, 1
        // Predicated region
        $region13: #{tpu_custom_call.1} parent=11 // pred_check
          %p208 = pneg %p62
        $region14: #{tpu_custom_call.1} parent=11 // pred_check_branch
          %210 = sbr.rel (%p208) target = $region16
        $region15: #{tpu_custom_call.1} parent=11 // pred_region
          _
        $region16: #{tpu_custom_call.1} parent=11 // pred_fallthru
          _
        // Predicated region
        $region17: #{tpu_custom_call.1} parent=11 // pred_check
          %p211 = pneg %p83
        $region18: #{tpu_custom_call.1} parent=11 // pred_check_branch
          %213 = sbr.rel (%p211) target = $region20
        $region19: #{tpu_custom_call.1} parent=11 // pred_region
          _
        $region20: #{tpu_custom_call.1} parent=11 // pred_fallthru
          _
        // Predicated region
        $region21: #{tpu_custom_call.1} parent=11 // pred_check
          %p214 = pneg %p104
        $region22: #{tpu_custom_call.1} parent=11 // pred_check_branch
          %216 = sbr.rel (%p214) target = $region24
        $region23: #{tpu_custom_call.1} parent=11 // pred_region
          %218 = vsyncadd [#allocation3], 0
          %s219 = sshll.u32 %s3, 4
          %s220 = int_to_ptr.hbm [resolvable:$true] %s219
          %s221 = sshll.u32 [#allocation2], 4
          %s222 = int_to_ptr.vmem [resolvable:$true] %s221
          %227 = dma.hbm_to_vmem [thread:$0]  %s220, 9216, %s222, [#allocation3], 64, 64, 4
        $region24: #{tpu_custom_call.1} parent=11 // pred_fallthru
          _
        // Predicated region
        $region25: #{tpu_custom_call.1} parent=11 // pred_check
          %p228 = pneg %p125
        $region26: #{tpu_custom_call.1} parent=11 // pred_check_branch
          %230 = sbr.rel (%p228) target = $region28
        $region27: #{tpu_custom_call.1} parent=11 // pred_region
          _
        $region28: #{tpu_custom_call.1} parent=11 // pred_fallthru
          _
        // Predicated region
        $region29: #{tpu_custom_call.1} parent=11 // pred_check
          %p231 = pneg %p146
        $region30: #{tpu_custom_call.1} parent=11 // pred_check_branch
          %233 = sbr.rel (%p231) target = $region32
        $region31: #{tpu_custom_call.1} parent=11 // pred_region
          %235 = vsyncadd [#allocation5], 0
          %s236 = sshll.u32 %s5, 4
          %s237 = int_to_ptr.hbm [resolvable:$true] %s236
          %s238 = sshll.u32 [#allocation4], 4
          %s239 = int_to_ptr.vmem [resolvable:$true] %s238
          %244 = dma.hbm_to_vmem [thread:$0]  %s237, 9216, %s239, [#allocation5], 64, 64, 4
        $region32: #{tpu_custom_call.1} parent=11 // pred_fallthru
          _
        // Predicated region
        $region33: #{tpu_custom_call.1} parent=11 // pred_check
          %p245 = pneg %p167
        $region34: #{tpu_custom_call.1} parent=11 // pred_check_branch
          %247 = sbr.rel (%p245) target = $region36
        $region35: #{tpu_custom_call.1} parent=11 // pred_region
          _
        $region36: #{tpu_custom_call.1} parent=11 // pred_fallthru
          _
      $region12: #{tpu_custom_call.1} parent=5 // pred_fallthru
        _
      %p248 = scmp.lt.s32.totalorder %s15, 2
      // Predicated region
      $region37: #{tpu_custom_call.1} parent=5 // pred_check
        %p249 = pneg %p248
      $region38: #{tpu_custom_call.1} parent=5 // pred_check_branch
        %251 = sbr.rel (%p249) target = $region40
      $region39: #{tpu_custom_call.1} parent=5 // pred_region
        // Predicated region
        $region41: #{tpu_custom_call.1} parent=39 // pred_check
          %p252 = pneg %p35
        $region42: #{tpu_custom_call.1} parent=39 // pred_check_branch
          %254 = sbr.rel (%p252) target = $region44
        $region43: #{tpu_custom_call.1} parent=39 // pred_region
          %p255 = scmp.lt.s32.totalorder %s15, 1
          %s256 = scalar_select %p255, %s15, 1
          %s257 = smul.addr %s256, 7
          %s258 = smul.addr %s257, 4
          %s259 = scalar_lea.vmem %s0, %s258
        $region44: #{tpu_custom_call.1} parent=39 // pred_fallthru
          _
      $region40: #{tpu_custom_call.1} parent=5 // pred_fallthru
        _
      %p260 = scmp.le.s32.totalorder 1, %s15
      %p261 = scmp.lt.s32.totalorder %s15, 3
      %p262 = pnand %p260, %p261
      %p263 = pneg %p262
      // Predicated region
      $region45: #{tpu_custom_call.1} parent=5 // pred_check
        _
      $region46: #{tpu_custom_call.1} parent=5 // pred_check_branch
        %265 = sbr.rel (%p262) target = $region48
      $region47: #{tpu_custom_call.1} parent=5 // pred_region
        %s266 = ssub.s32 %s15, 1
        // Predicated region
        $region49: #{tpu_custom_call.1} parent=47 // pred_check
          %p267 = pneg %p104
        $region50: #{tpu_custom_call.1} parent=47 // pred_check_branch
          %269 = sbr.rel (%p267) target = $region52
        $region51: #{tpu_custom_call.1} parent=47 // pred_region
          %271 = dma.done [#allocation3], 9216
        $region52: #{tpu_custom_call.1} parent=47 // pred_fallthru
          _
        // Predicated region
        $region53: #{tpu_custom_call.1} parent=47 // pred_check
          %p272 = pneg %p146
        $region54: #{tpu_custom_call.1} parent=47 // pred_check_branch
          %274 = sbr.rel (%p272) target = $region56
        $region55: #{tpu_custom_call.1} parent=47 // pred_region
          %276 = dma.done [#allocation5], 9216
        $region56: #{tpu_custom_call.1} parent=47 // pred_fallthru
          _
        %p277 = scmp.lt.s32.totalorder %s20, 1
        %s278 = scalar_select %p277, %s20, 1
        %s279 = smul.addr %s278, 7
        %s280 = smul.addr %s279, 4
        %s281 = scalar_lea.vmem %s0, %s280
        %p282 = pneg %p41
        %p283 = pneg %p38
        %p284 = pneg %p62
        %p285 = pneg %p59
        %p286 = pneg %p83
        %p287 = pneg %p80
        %p288 = pneg %p104
        %p289 = pneg %p101
        %p290 = pneg %p125
        %p291 = pneg %p122
        %p292 = pneg %p146
        %p293 = pneg %p143
        %p294 = pneg %p167
        %p295 = pneg %p164
        %p296 = pneg %p193
        %p297 = pneg %p190
        %p298 = scmp.lt.s32.totalorder %s20, 1
        %s299 = scalar_select %p298, %s20, 1
        %s300 = smul.addr %s299, 3
        %s301 = smul.addr %s300, 8
        %s302 = scalar_lea.vmem %s7, %s301
        %p303 = scmp.lt.s32.totalorder %s20, 1
        %s304 = scalar_select %p303, %s20, 1
        %s305 = smul.addr %s304, 7
        %s306 = smul.addr %s305, 4
        %s307 = scalar_lea.vmem %s0, %s306
        %p308 = scmp.lt.s32.totalorder %s20, 1
        %s309 = scalar_select %p308, %s20, 1
        %s310 = smul.addr %s309, 3
        %s311 = smul.addr %s310, 8
        %s312 = scalar_lea.vmem %s7, %s311
        %v314 = vld [vmem:[%s307] sm:$0xf]
        %v315 = vld [vmem:[%s307 + $0x4] sm:$0xf]
        %v316 = vld [vmem:[%s307 + $0x8] sm:$0xf]
        %v317 = vld [vmem:[%s307 + $0xc] sm:$0xf]
        %v318 = vld [vmem:[%s307 + $0x10] sm:$0xf]
        %v319 = vld [vmem:[%s307 + $0x14] sm:$0xf]
        %v320 = vld [vmem:[%s307 + $0x18] sm:$0x1]
        %v321 = vld [vmem:[%s1] sm:$0xf]
        %v322 = vld [vmem:[%s1 + $0x4] sm:$0xf]
        %v323 = vld [vmem:[%s1 + $0x8] sm:$0xf]
        %v324 = vld [vmem:[%s1 + $0xc] sm:$0xf]
        %v325 = vld [vmem:[%s1 + $0x10] sm:$0x3]
        %v333 = vunpack.c.l.b16 %v314
        %v334 = vunpack.c.l.b16 %v315
        %v335 = vunpack.c.l.b16 %v316
        %v336 = vunpack.c.l.b16 %v317
        %v337 = vunpack.c.l.b16 %v318
        %v338 = vunpack.c.l.b16 %v319
        %v339 = vunpack.c.l.b16 %v320
        %v340 = vpack.c.b16 %v334, %v333
        %v341 = vpack.c.b16 %v336, %v335
        %v342 = vpack.c.b16 %v338, %v337
        %v343 = vpack.c.b16 %v339, %v339
        %v349 = vunpack.c.l.b16 %v321
        %v350 = vunpack.c.l.b16 %v322
        %v351 = vunpack.c.l.b16 %v323
        %v352 = vunpack.c.l.b16 %v324
        %v353 = vunpack.c.l.b16 %v325
        %v354 = vpack.c.b16 %v350, %v349
        %v355 = vpack.c.b16 %v352, %v351
        %v356 = vpack.c.b16 %v353, %v353
        %vm359 = vcmask 293888
        %v361 = vsel %vm359, %v340, 0
        %v364 = vsel %vm359, %v341, 0
        %v367 = vsel %vm359, %v342, 0
        %v370 = vsel %vm359, %v343, 0
        %vm372 = vcmask 1041408
        %v374 = vsel %vm372, %v356, 0
        %376 = vmatpush.bf16.msra.mxu0 0
        %377 = vmatpush.bf16.msra.mxu0 0
        %378 = vmatpush.bf16.msra.mxu0 0
        %379 = vmatpush.bf16.msra.mxu0 0
        %380 = vmatpush.bf16.msra.mxu0 0
        %381 = vmatpush.bf16.msra.mxu0 %v374
        %382 = vmatpush.bf16.msra.mxu0 %v355
        %383 = vmatpush.bf16.msra.mxu0 %v354
        %384 = vmatmul.bf16.gmra.mxu0 %v361
        %v385 = vpop.f32.mrf.mxu0
        %v386 = vadd.f32 0.0, %v385
        %v387 = vpop.f32.mrf.mxu0
        %v388 = vadd.f32 0.0, %v387
        %389 = vmatmul.bf16.gmra.mxu0 %v364
        %v390 = vpop.f32.mrf.mxu0
        %v391 = vadd.f32 0.0, %v390
        %v392 = vpop.f32.mrf.mxu0
        %v393 = vadd.f32 0.0, %v392
        %394 = vmatmul.bf16.gmra.mxu0 %v367
        %v395 = vpop.f32.mrf.mxu0
        %v396 = vadd.f32 0.0, %v395
        %v397 = vpop.f32.mrf.mxu0
        %v398 = vadd.f32 0.0, %v397
        %399 = vmatmul.bf16.gmra.mxu0 %v370
        %v400 = vpop.f32.mrf.mxu0
        %v401 = vadd.f32 0.0, %v400
        %v402 = vpop.f32.mrf.mxu0
        %403 = vdwg.mxu0
        %v404 = vld [vmem:[%s2] sm:$0x1]
        %v406 = vperm.slane %v404, 0
        %v408 = vadd.f32 %v386, %v406
        %v409 = vadd.f32 %v388, %v406
        %v410 = vadd.f32 %v391, %v406
        %v411 = vadd.f32 %v393, %v406
        %v412 = vadd.f32 %v396, %v406
        %v413 = vadd.f32 %v398, %v406
        %v414 = vadd.f32 %v401, %v406
        %v415 = vmax.f32 %v408, 0.0
        %v416 = vmax.f32 %v409, 0.0
        %v417 = vmax.f32 %v410, 0.0
        %v418 = vmax.f32 %v411, 0.0
        %v419 = vmax.f32 %v412, 0.0
        %v420 = vmax.f32 %v413, 0.0
        %v421 = vmax.f32 %v414, 0.0
        %v422 = vpack.c.bf16 %v415, %v415
        %v423 = vpack.c.bf16 %v416, %v416
        %v424 = vpack.c.bf16 %v417, %v417
        %v425 = vpack.c.bf16 %v418, %v418
        %v426 = vpack.c.bf16 %v419, %v419
        %v427 = vpack.c.bf16 %v420, %v420
        %v428 = vpack.c.bf16 %v421, %v421
        %v434 = vunpack.c.l.b16 %v422
        %v435 = vunpack.c.l.b16 %v423
        %v436 = vunpack.c.l.b16 %v424
        %v437 = vunpack.c.l.b16 %v425
        %v438 = vunpack.c.l.b16 %v426
        %v439 = vpack.c.b16 %v435, %v434
        %v440 = vpack.c.b16 %v437, %v436
        %v441 = vpack.c.b16 %v438, %v438
        %vm445 = vsmask.f32 7424
        %v447 = vshrl.u32 %v439, 16
        %v449 = vshll.u32 %v439, 16
        %v451 = vrot.slane %v449, 1
        %v452 = vor.u32 %v447, %v451
        %v454 = vshll.u32 %v440, 16
        %v456 = vrot.slane %v454, 1
        %v457 = vsel %vm445, %v452, %v456
        %v458 = vshrl.u32 %v440, 16
        %v460 = vor.u32 %v458, %v456
        %v462 = vshll.u32 %v441, 16
        %v464 = vrot.slane %v462, 1
        %v465 = vsel %vm445, %v460, %v464
        %v466 = vshrl.u32 %v441, 16
        %vm471 = vcmask 1046528
        %v472 = vrot.slane %v439, 1
        %v473 = vrot.slane %v440, 1
        %v474 = vsel %vm471, %v472, %v473
        %v475 = vrot.slane %v441, 1
        %v476 = vsel %vm471, %v473, %v475
        %v480 = vld [vmem:[#allocation2] sm:$0xf]
        %v481 = vld [vmem:[#allocation2 + $0x4] sm:$0xf]
        %v482 = vld [vmem:[#allocation2 + $0x8] sm:$0xf]
        %v483 = vld [vmem:[#allocation2 + $0xc] sm:$0xf]
        %v484 = vld [vmem:[#allocation2 + $0x10] sm:$0xf]
        %v485 = vld [vmem:[#allocation2 + $0x14] sm:$0xf]
        %v486 = vld [vmem:[#allocation2 + $0x18] sm:$0xf]
        %v487 = vld [vmem:[#allocation2 + $0x1c] sm:$0xf]
        %v488 = vld [vmem:[#allocation2 + $0x20] sm:$0xf]
        %v489 = vld [vmem:[#allocation2 + $0x24] sm:$0xf]
        %v490 = vld [vmem:[#allocation2 + $0x28] sm:$0xf]
        %v491 = vld [vmem:[#allocation2 + $0x2c] sm:$0xf]
        %v492 = vld [vmem:[#allocation2 + $0x30] sm:$0xf]
        %v493 = vld [vmem:[#allocation2 + $0x34] sm:$0xf]
        %v494 = vld [vmem:[#allocation2 + $0x38] sm:$0xf]
        %v495 = vld [vmem:[#allocation2 + $0x3c] sm:$0xf]
        %v496 = vld [vmem:[#allocation2 + $0x40] sm:$0xf]
        %v497 = vld [vmem:[#allocation2 + $0x44] sm:$0xf]
        %v498 = vld [vmem:[#allocation2 + $0x48] sm:$0xf]
        %v499 = vld [vmem:[#allocation2 + $0x4c] sm:$0xf]
        %v500 = vld [vmem:[#allocation2 + $0x50] sm:$0xf]
        %v501 = vld [vmem:[#allocation2 + $0x54] sm:$0xf]
        %v502 = vld [vmem:[#allocation2 + $0x58] sm:$0xf]
        %v503 = vld [vmem:[#allocation2 + $0x5c] sm:$0xf]
        %v504 = vld [vmem:[#allocation2 + $0x60] sm:$0xf]
        %v505 = vld [vmem:[#allocation2 + $0x64] sm:$0xf]
        %v506 = vld [vmem:[#allocation2 + $0x68] sm:$0xf]
        %v507 = vld [vmem:[#allocation2 + $0x6c] sm:$0xf]
        %v508 = vld [vmem:[#allocation2 + $0x70] sm:$0xf]
        %v509 = vld [vmem:[#allocation2 + $0x74] sm:$0xf]
        %v510 = vld [vmem:[#allocation2 + $0x78] sm:$0xf]
        %v511 = vld [vmem:[#allocation2 + $0x7c] sm:$0xf]
        %v512 = vld [vmem:[#allocation2 + $0x80] sm:$0xf]
        %v513 = vld [vmem:[#allocation2 + $0x84] sm:$0xf]
        %v514 = vld [vmem:[#allocation2 + $0x88] sm:$0xf]
        %v515 = vld [vmem:[#allocation2 + $0x8c] sm:$0xf]
        %v516 = vld [vmem:[#allocation2 + $0x90] sm:$0xf]
        %v517 = vld [vmem:[#allocation2 + $0x94] sm:$0xf]
        %v518 = vld [vmem:[#allocation2 + $0x98] sm:$0xf]
        %v519 = vld [vmem:[#allocation2 + $0x9c] sm:$0xf]
        %v520 = vld [vmem:[#allocation2 + $0xa0] sm:$0xf]
        %v521 = vld [vmem:[#allocation2 + $0xa4] sm:$0xf]
        %v522 = vld [vmem:[#allocation2 + $0xa8] sm:$0xf]
        %v523 = vld [vmem:[#allocation2 + $0xac] sm:$0xf]
        %v524 = vld [vmem:[#allocation2 + $0xb0] sm:$0xf]
        %v525 = vld [vmem:[#allocation2 + $0xb4] sm:$0xf]
        %v526 = vld [vmem:[#allocation2 + $0xb8] sm:$0xf]
        %v527 = vld [vmem:[#allocation2 + $0xbc] sm:$0xf]
        %v529 = vunpack.c.l.b16 %v427
        %v530 = vpack.c.b16 %v436, %v435
        %v531 = vpack.c.b16 %v438, %v437
        %v532 = vpack.c.b16 %v529, %v529
        %vm533 = vsmask.f32 3328
        %v535 = vshrl.u32 %v530, 16
        %v537 = vrot.slane %v535, 4
        %v538 = vshll.u32 %v530, 16
        %v540 = vrot.slane %v538, 5
        %v541 = vor.u32 %v537, %v540
        %v543 = vshrl.u32 %v531, 16
        %v545 = vrot.slane %v543, 4
        %v546 = vshll.u32 %v531, 16
        %v548 = vrot.slane %v546, 5
        %v549 = vor.u32 %v545, %v548
        %v550 = vsel %vm533, %v541, %v549
        %v552 = vshll.u32 %v532, 16
        %v554 = vrot.slane %v552, 5
        %v555 = vsel %vm533, %v549, %v554
        %vm556 = vcmask 1042432
        %v557 = vrot.slane %v530, 5
        %v558 = vrot.slane %v531, 5
        %v559 = vsel %vm556, %v557, %v558
        %v560 = vrot.slane %v532, 5
        %v561 = vsel %vm556, %v558, %v560
        %s562 = scalar_lea.vmem [#allocation2], 192
        %v563 = vld [vmem:[%s562] sm:$0xf]
        %v564 = vld [vmem:[%s562 + $0x4] sm:$0xf]
        %v565 = vld [vmem:[%s562 + $0x8] sm:$0xf]
        %v566 = vld [vmem:[%s562 + $0xc] sm:$0xf]
        %v567 = vld [vmem:[%s562 + $0x10] sm:$0xf]
        %v568 = vld [vmem:[%s562 + $0x14] sm:$0xf]
        %v569 = vld [vmem:[%s562 + $0x18] sm:$0xf]
        %v570 = vld [vmem:[%s562 + $0x1c] sm:$0xf]
        %v571 = vld [vmem:[%s562 + $0x20] sm:$0xf]
        %v572 = vld [vmem:[%s562 + $0x24] sm:$0xf]
        %v573 = vld [vmem:[%s562 + $0x28] sm:$0xf]
        %v574 = vld [vmem:[%s562 + $0x2c] sm:$0xf]
        %v575 = vld [vmem:[%s562 + $0x30] sm:$0xf]
        %v576 = vld [vmem:[%s562 + $0x34] sm:$0xf]
        %v577 = vld [vmem:[%s562 + $0x38] sm:$0xf]
        %v578 = vld [vmem:[%s562 + $0x3c] sm:$0xf]
        %v579 = vld [vmem:[%s562 + $0x40] sm:$0xf]
        %v580 = vld [vmem:[%s562 + $0x44] sm:$0xf]
        %v581 = vld [vmem:[%s562 + $0x48] sm:$0xf]
        %v582 = vld [vmem:[%s562 + $0x4c] sm:$0xf]
        %v583 = vld [vmem:[%s562 + $0x50] sm:$0xf]
        %v584 = vld [vmem:[%s562 + $0x54] sm:$0xf]
        %v585 = vld [vmem:[%s562 + $0x58] sm:$0xf]
        %v586 = vld [vmem:[%s562 + $0x5c] sm:$0xf]
        %v587 = vld [vmem:[%s562 + $0x60] sm:$0xf]
        %v588 = vld [vmem:[%s562 + $0x64] sm:$0xf]
        %v589 = vld [vmem:[%s562 + $0x68] sm:$0xf]
        %v590 = vld [vmem:[%s562 + $0x6c] sm:$0xf]
        %v591 = vld [vmem:[%s562 + $0x70] sm:$0xf]
        %v592 = vld [vmem:[%s562 + $0x74] sm:$0xf]
        %v593 = vld [vmem:[%s562 + $0x78] sm:$0xf]
        %v594 = vld [vmem:[%s562 + $0x7c] sm:$0xf]
        %v595 = vld [vmem:[%s562 + $0x80] sm:$0xf]
        %v596 = vld [vmem:[%s562 + $0x84] sm:$0xf]
        %v597 = vld [vmem:[%s562 + $0x88] sm:$0xf]
        %v598 = vld [vmem:[%s562 + $0x8c] sm:$0xf]
        %v599 = vld [vmem:[%s562 + $0x90] sm:$0xf]
        %v600 = vld [vmem:[%s562 + $0x94] sm:$0xf]
        %v601 = vld [vmem:[%s562 + $0x98] sm:$0xf]
        %v602 = vld [vmem:[%s562 + $0x9c] sm:$0xf]
        %v603 = vld [vmem:[%s562 + $0xa0] sm:$0xf]
        %v604 = vld [vmem:[%s562 + $0xa4] sm:$0xf]
        %v605 = vld [vmem:[%s562 + $0xa8] sm:$0xf]
        %v606 = vld [vmem:[%s562 + $0xac] sm:$0xf]
        %v607 = vld [vmem:[%s562 + $0xb0] sm:$0xf]
        %v608 = vld [vmem:[%s562 + $0xb4] sm:$0xf]
        %v609 = vld [vmem:[%s562 + $0xb8] sm:$0xf]
        %v610 = vld [vmem:[%s562 + $0xbc] sm:$0xf]
        %vm611 = vsmask.f32 4352
        %v612 = vrot.slane %v447, 3
        %v613 = vrot.slane %v449, 4
        %v614 = vor.u32 %v612, %v613
        %v615 = vrot.slane %v458, 3
        %v616 = vrot.slane %v454, 4
        %v617 = vor.u32 %v615, %v616
        %v618 = vsel %vm611, %v614, %v617
        %v620 = vshrl.u32 %v541, 16
        %v622 = vrot.slane %v620, 3
        %v623 = vshll.u32 %v541, 16
        %v625 = vrot.slane %v623, 4
        %v626 = vor.u32 %v622, %v625
        %v628 = vshrl.u32 %v550, 16
        %v630 = vrot.slane %v628, 3
        %v631 = vshll.u32 %v550, 16
        %v633 = vrot.slane %v631, 4
        %v634 = vor.u32 %v630, %v633
        %v635 = vsel %vm611, %v626, %v634
        %v637 = vshrl.u32 %v557, 16
        %v639 = vrot.slane %v637, 3
        %v640 = vshll.u32 %v557, 16
        %v642 = vrot.slane %v640, 4
        %v643 = vor.u32 %v639, %v642
        %v645 = vshrl.u32 %v559, 16
        %v647 = vrot.slane %v645, 3
        %v648 = vshll.u32 %v559, 16
        %v650 = vrot.slane %v648, 4
        %v651 = vor.u32 %v647, %v650
        %v652 = vsel %vm611, %v643, %v651
        %v653 = vrot.slane %v466, 3
        %v654 = vrot.slane %v462, 4
        %v655 = vor.u32 %v653, %v654
        %v656 = vsel %vm611, %v617, %v655
        %v658 = vshrl.u32 %v555, 16
        %v660 = vrot.slane %v658, 3
        %v661 = vshll.u32 %v555, 16
        %v663 = vrot.slane %v661, 4
        %v664 = vor.u32 %v660, %v663
        %v665 = vsel %vm611, %v634, %v664
        %v667 = vshrl.u32 %v561, 16
        %v669 = vrot.slane %v667, 3
        %v670 = vshll.u32 %v561, 16
        %v672 = vrot.slane %v670, 4
        %v673 = vor.u32 %v669, %v672
        %v674 = vsel %vm611, %v651, %v673
        %v732 = vunpack.c.l.b16 %v563
        %v733 = vunpack.c.l.b16 %v564
        %v734 = vunpack.c.l.b16 %v565
        %v735 = vunpack.c.l.b16 %v566
        %v736 = vunpack.c.l.b16 %v567
        %v737 = vunpack.c.l.b16 %v568
        %v738 = vunpack.c.l.b16 %v569
        %v739 = vunpack.c.l.b16 %v570
        %v740 = vunpack.c.l.b16 %v571
        %v741 = vunpack.c.l.b16 %v572
        %v742 = vunpack.c.l.b16 %v573
        %v743 = vunpack.c.l.b16 %v574
        %v744 = vunpack.c.l.b16 %v575
        %v745 = vunpack.c.l.b16 %v576
        %v746 = vunpack.c.l.b16 %v577
        %v747 = vunpack.c.l.b16 %v578
        %v748 = vunpack.c.l.b16 %v579
        %v749 = vunpack.c.l.b16 %v580
        %v750 = vunpack.c.l.b16 %v581
        %v751 = vunpack.c.l.b16 %v582
        %v752 = vunpack.c.l.b16 %v583
        %v753 = vunpack.c.l.b16 %v584
        %v754 = vunpack.c.l.b16 %v585
        %v755 = vunpack.c.l.b16 %v586
        %v756 = vunpack.c.l.b16 %v587
        %v757 = vunpack.c.l.b16 %v588
        %v758 = vunpack.c.l.b16 %v589
        %v759 = vunpack.c.l.b16 %v590
        %v760 = vunpack.c.l.b16 %v591
        %v761 = vunpack.c.l.b16 %v592
        %v762 = vunpack.c.l.b16 %v593
        %v763 = vunpack.c.l.b16 %v594
        %v764 = vunpack.c.l.b16 %v595
        %v765 = vunpack.c.l.b16 %v596
        %v766 = vunpack.c.l.b16 %v597
        %v767 = vunpack.c.l.b16 %v598
        %v768 = vunpack.c.l.b16 %v599
        %v769 = vunpack.c.l.b16 %v600
        %v770 = vunpack.c.l.b16 %v601
        %v771 = vunpack.c.l.b16 %v602
        %v772 = vunpack.c.l.b16 %v603
        %v773 = vunpack.c.l.b16 %v604
        %v774 = vunpack.c.l.b16 %v605
        %v775 = vunpack.c.l.b16 %v606
        %v776 = vunpack.c.l.b16 %v607
        %v777 = vunpack.c.l.b16 %v608
        %v778 = vunpack.c.l.b16 %v609
        %v779 = vunpack.c.l.b16 %v610
        %v780 = vpack.c.b16 %v733, %v732
        %v781 = vpack.c.b16 %v735, %v734
        %v782 = vpack.c.b16 %v737, %v736
        %v783 = vpack.c.b16 %v739, %v738
        %v784 = vpack.c.b16 %v741, %v740
        %v785 = vpack.c.b16 %v743, %v742
        %v786 = vpack.c.b16 %v745, %v744
        %v787 = vpack.c.b16 %v747, %v746
        %v788 = vpack.c.b16 %v749, %v748
        %v789 = vpack.c.b16 %v751, %v750
        %v790 = vpack.c.b16 %v753, %v752
        %v791 = vpack.c.b16 %v755, %v754
        %v792 = vpack.c.b16 %v757, %v756
        %v793 = vpack.c.b16 %v759, %v758
        %v794 = vpack.c.b16 %v761, %v760
        %v795 = vpack.c.b16 %v763, %v762
        %v796 = vpack.c.b16 %v765, %v764
        %v797 = vpack.c.b16 %v767, %v766
        %v798 = vpack.c.b16 %v769, %v768
        %v799 = vpack.c.b16 %v771, %v770
        %v800 = vpack.c.b16 %v773, %v772
        %v801 = vpack.c.b16 %v775, %v774
        %v802 = vpack.c.b16 %v777, %v776
        %v803 = vpack.c.b16 %v779, %v778
        %828 = vmatpush.bf16.msra.mxu0 %v787
        %829 = vmatpush.bf16.msra.mxu0 %v786
        %830 = vmatpush.bf16.msra.mxu0 %v785
        %831 = vmatpush.bf16.msra.mxu0 %v784
        %832 = vmatpush.bf16.msra.mxu0 %v783
        %833 = vmatpush.bf16.msra.mxu0 %v782
        %834 = vmatpush.bf16.msra.mxu0 %v781
        %835 = vmatpush.bf16.msra.mxu0 %v780
        %836 = vmatmul.bf16.gmra.mxu0 %v618
        %v837 = vpop.f32.mrf.mxu0
        %v838 = vadd.f32 0.0, %v837
        %v839 = vpop.f32.mrf.mxu0
        %v840 = vadd.f32 0.0, %v839
        %841 = vmatmul.bf16.gmra.mxu0 %v656
        %v842 = vpop.f32.mrf.mxu0
        %v843 = vadd.f32 0.0, %v842
        %v844 = vpop.f32.mrf.mxu0
        %v845 = vadd.f32 0.0, %v844
        %846 = vmatmul.bf16.gmra.mxu0 %v653
        %v847 = vpop.f32.mrf.mxu0
        %v848 = vadd.f32 0.0, %v847
        %v849 = vpop.f32.mrf.mxu0
        %850 = vdwg.mxu0
        %851 = vmatpush.bf16.msra.mxu0 %v795
        %852 = vmatpush.bf16.msra.mxu0 %v794
        %853 = vmatpush.bf16.msra.mxu0 %v793
        %854 = vmatpush.bf16.msra.mxu0 %v792
        %855 = vmatpush.bf16.msra.mxu0 %v791
        %856 = vmatpush.bf16.msra.mxu0 %v790
        %857 = vmatpush.bf16.msra.mxu0 %v789
        %858 = vmatpush.bf16.msra.mxu0 %v788
        %859 = vmatmul.bf16.gmra.mxu0 %v635
        %v860 = vpop.f32.mrf.mxu0
        %v861 = vadd.f32 %v838, %v860
        %v862 = vpop.f32.mrf.mxu0
        %v863 = vadd.f32 %v840, %v862
        %864 = vmatmul.bf16.gmra.mxu0 %v665
        %v865 = vpop.f32.mrf.mxu0
        %v866 = vadd.f32 %v843, %v865
        %v867 = vpop.f32.mrf.mxu0
        %v868 = vadd.f32 %v845, %v867
        %869 = vmatmul.bf16.gmra.mxu0 %v660
        %v870 = vpop.f32.mrf.mxu0
        %v871 = vadd.f32 %v848, %v870
        %v872 = vpop.f32.mrf.mxu0
        %873 = vdwg.mxu0
        %874 = vmatpush.bf16.msra.mxu0 %v803
        %875 = vmatpush.bf16.msra.mxu0 %v802
        %876 = vmatpush.bf16.msra.mxu0 %v801
        %877 = vmatpush.bf16.msra.mxu0 %v800
        %878 = vmatpush.bf16.msra.mxu0 %v799
        %879 = vmatpush.bf16.msra.mxu0 %v798
        %880 = vmatpush.bf16.msra.mxu0 %v797
        %881 = vmatpush.bf16.msra.mxu0 %v796
        %882 = vmatmul.bf16.gmra.mxu0 %v652
        %v883 = vpop.f32.mrf.mxu0
        %v884 = vadd.f32 %v861, %v883
        %v885 = vpop.f32.mrf.mxu0
        %v886 = vadd.f32 %v863, %v885
        %887 = vmatmul.bf16.gmra.mxu0 %v674
        %v888 = vpop.f32.mrf.mxu0
        %v889 = vadd.f32 %v866, %v888
        %v890 = vpop.f32.mrf.mxu0
        %v891 = vadd.f32 %v868, %v890
        %892 = vmatmul.bf16.gmra.mxu0 %v669
        %v893 = vpop.f32.mrf.mxu0
        %v894 = vadd.f32 %v871, %v893
        %v895 = vpop.f32.mrf.mxu0
        %896 = vdwg.mxu0
        %v945 = vunpack.c.l.b16 %v480
        %v946 = vunpack.c.l.b16 %v481
        %v947 = vunpack.c.l.b16 %v482
        %v948 = vunpack.c.l.b16 %v483
        %v949 = vunpack.c.l.b16 %v484
        %v950 = vunpack.c.l.b16 %v485
        %v951 = vunpack.c.l.b16 %v486
        %v952 = vunpack.c.l.b16 %v487
        %v953 = vunpack.c.l.b16 %v488
        %v954 = vunpack.c.l.b16 %v489
        %v955 = vunpack.c.l.b16 %v490
        %v956 = vunpack.c.l.b16 %v491
        %v957 = vunpack.c.l.b16 %v492
        %v958 = vunpack.c.l.b16 %v493
        %v959 = vunpack.c.l.b16 %v494
        %v960 = vunpack.c.l.b16 %v495
        %v961 = vunpack.c.l.b16 %v496
        %v962 = vunpack.c.l.b16 %v497
        %v963 = vunpack.c.l.b16 %v498
        %v964 = vunpack.c.l.b16 %v499
        %v965 = vunpack.c.l.b16 %v500
        %v966 = vunpack.c.l.b16 %v501
        %v967 = vunpack.c.l.b16 %v502
        %v968 = vunpack.c.l.b16 %v503
        %v969 = vunpack.c.l.b16 %v504
        %v970 = vunpack.c.l.b16 %v505
        %v971 = vunpack.c.l.b16 %v506
        %v972 = vunpack.c.l.b16 %v507
        %v973 = vunpack.c.l.b16 %v508
        %v974 = vunpack.c.l.b16 %v509
        %v975 = vunpack.c.l.b16 %v510
        %v976 = vunpack.c.l.b16 %v511
        %v977 = vunpack.c.l.b16 %v512
        %v978 = vunpack.c.l.b16 %v513
        %v979 = vunpack.c.l.b16 %v514
        %v980 = vunpack.c.l.b16 %v515
        %v981 = vunpack.c.l.b16 %v516
        %v982 = vunpack.c.l.b16 %v517
        %v983 = vunpack.c.l.b16 %v518
        %v984 = vunpack.c.l.b16 %v519
        %v985 = vunpack.c.l.b16 %v520
        %v986 = vunpack.c.l.b16 %v521
        %v987 = vunpack.c.l.b16 %v522
        %v988 = vunpack.c.l.b16 %v523
        %v989 = vunpack.c.l.b16 %v524
        %v990 = vunpack.c.l.b16 %v525
        %v991 = vunpack.c.l.b16 %v526
        %v992 = vunpack.c.l.b16 %v527
        %v993 = vpack.c.b16 %v946, %v945
        %v994 = vpack.c.b16 %v948, %v947
        %v995 = vpack.c.b16 %v950, %v949
        %v996 = vpack.c.b16 %v952, %v951
        %v997 = vpack.c.b16 %v954, %v953
        %v998 = vpack.c.b16 %v956, %v955
        %v999 = vpack.c.b16 %v958, %v957
        %v1000 = vpack.c.b16 %v960, %v959
        %v1001 = vpack.c.b16 %v962, %v961
        %v1002 = vpack.c.b16 %v964, %v963
        %v1003 = vpack.c.b16 %v966, %v965
        %v1004 = vpack.c.b16 %v968, %v967
        %v1005 = vpack.c.b16 %v970, %v969
        %v1006 = vpack.c.b16 %v972, %v971
        %v1007 = vpack.c.b16 %v974, %v973
        %v1008 = vpack.c.b16 %v976, %v975
        %v1009 = vpack.c.b16 %v978, %v977
        %v1010 = vpack.c.b16 %v980, %v979
        %v1011 = vpack.c.b16 %v982, %v981
        %v1012 = vpack.c.b16 %v984, %v983
        %v1013 = vpack.c.b16 %v986, %v985
        %v1014 = vpack.c.b16 %v988, %v987
        %v1015 = vpack.c.b16 %v990, %v989
        %v1016 = vpack.c.b16 %v992, %v991
        %1041 = vmatpush.bf16.msra.mxu0 %v1000
        %1042 = vmatpush.bf16.msra.mxu0 %v999
        %1043 = vmatpush.bf16.msra.mxu0 %v998
        %1044 = vmatpush.bf16.msra.mxu0 %v997
        %1045 = vmatpush.bf16.msra.mxu0 %v996
        %1046 = vmatpush.bf16.msra.mxu0 %v995
        %1047 = vmatpush.bf16.msra.mxu0 %v994
        %1048 = vmatpush.bf16.msra.mxu0 %v993
        %1049 = vmatmul.bf16.gmra.mxu0 %v439
        %v1050 = vpop.f32.mrf.mxu0
        %v1051 = vadd.f32 %v884, %v1050
        %v1052 = vpop.f32.mrf.mxu0
        %v1053 = vadd.f32 %v886, %v1052
        %1054 = vmatmul.bf16.gmra.mxu0 %v440
        %v1055 = vpop.f32.mrf.mxu0
        %v1056 = vadd.f32 %v889, %v1055
        %v1057 = vpop.f32.mrf.mxu0
        %v1058 = vadd.f32 %v891, %v1057
        %1059 = vmatmul.bf16.gmra.mxu0 %v441
        %v1060 = vpop.f32.mrf.mxu0
        %v1061 = vadd.f32 %v894, %v1060
        %v1062 = vpop.f32.mrf.mxu0
        %1063 = vdwg.mxu0
        %1064 = vmatpush.bf16.msra.mxu0 %v1008
        %1065 = vmatpush.bf16.msra.mxu0 %v1007
        %1066 = vmatpush.bf16.msra.mxu0 %v1006
        %1067 = vmatpush.bf16.msra.mxu0 %v1005
        %1068 = vmatpush.bf16.msra.mxu0 %v1004
        %1069 = vmatpush.bf16.msra.mxu0 %v1003
        %1070 = vmatpush.bf16.msra.mxu0 %v1002
        %1071 = vmatpush.bf16.msra.mxu0 %v1001
        %1072 = vmatmul.bf16.gmra.mxu0 %v457
        %v1073 = vpop.f32.mrf.mxu0
        %v1074 = vadd.f32 %v1051, %v1073
        %v1075 = vpop.f32.mrf.mxu0
        %v1076 = vadd.f32 %v1053, %v1075
        %1077 = vmatmul.bf16.gmra.mxu0 %v465
        %v1078 = vpop.f32.mrf.mxu0
        %v1079 = vadd.f32 %v1056, %v1078
        %v1080 = vpop.f32.mrf.mxu0
        %v1081 = vadd.f32 %v1058, %v1080
        %1082 = vmatmul.bf16.gmra.mxu0 %v466
        %v1083 = vpop.f32.mrf.mxu0
        %v1084 = vadd.f32 %v1061, %v1083
        %v1085 = vpop.f32.mrf.mxu0
        %1086 = vdwg.mxu0
        %1087 = vmatpush.bf16.msra.mxu0 %v1016
        %1088 = vmatpush.bf16.msra.mxu0 %v1015
        %1089 = vmatpush.bf16.msra.mxu0 %v1014
        %1090 = vmatpush.bf16.msra.mxu0 %v1013
        %1091 = vmatpush.bf16.msra.mxu0 %v1012
        %1092 = vmatpush.bf16.msra.mxu0 %v1011
        %1093 = vmatpush.bf16.msra.mxu0 %v1010
        %1094 = vmatpush.bf16.msra.mxu0 %v1009
        %1095 = vmatmul.bf16.gmra.mxu0 %v474
        %v1096 = vpop.f32.mrf.mxu0
        %v1097 = vadd.f32 %v1074, %v1096
        %v1098 = vpop.f32.mrf.mxu0
        %v1099 = vadd.f32 %v1076, %v1098
        %1100 = vmatmul.bf16.gmra.mxu0 %v476
        %v1101 = vpop.f32.mrf.mxu0
        %v1102 = vadd.f32 %v1079, %v1101
        %v1103 = vpop.f32.mrf.mxu0
        %v1104 = vadd.f32 %v1081, %v1103
        %1105 = vmatmul.bf16.gmra.mxu0 %v475
        %v1106 = vpop.f32.mrf.mxu0
        %v1107 = vadd.f32 %v1084, %v1106
        %v1108 = vpop.f32.mrf.mxu0
        %1109 = vdwg.mxu0
        %v1110 = vrot.slane %v538, 1
        %v1111 = vor.u32 %v535, %v1110
        %v1112 = vrot.slane %v546, 1
        %v1113 = vsel %vm445, %v1111, %v1112
        %v1114 = vor.u32 %v543, %v1112
        %v1115 = vrot.slane %v552, 1
        %v1116 = vsel %vm445, %v1114, %v1115
        %v1117 = vshrl.u32 %v532, 16
        %v1119 = vor.u32 %v1117, %v1115
        %v1121 = vunpack.c.l.b16 %v428
        %v1122 = vpack.c.b16 %v529, %v438
        %v1123 = vpack.c.b16 %v1121, %v1121
        %v1124 = vrot.slane %v440, 5
        %v1125 = vrot.slane %v1122, 5
        %v1126 = vsel %vm556, %v1124, %v1125
        %v1127 = vrot.slane %v1123, 5
        %v1128 = vsel %vm556, %v1125, %v1127
        %s1129 = scalar_lea.vmem [#allocation2], 384
        %v1130 = vld [vmem:[%s1129] sm:$0xf]
        %v1131 = vld [vmem:[%s1129 + $0x4] sm:$0xf]
        %v1132 = vld [vmem:[%s1129 + $0x8] sm:$0xf]
        %v1133 = vld [vmem:[%s1129 + $0xc] sm:$0xf]
        %v1134 = vld [vmem:[%s1129 + $0x10] sm:$0xf]
        %v1135 = vld [vmem:[%s1129 + $0x14] sm:$0xf]
        %v1136 = vld [vmem:[%s1129 + $0x18] sm:$0xf]
        %v1137 = vld [vmem:[%s1129 + $0x1c] sm:$0xf]
        %v1138 = vld [vmem:[%s1129 + $0x20] sm:$0xf]
        %v1139 = vld [vmem:[%s1129 + $0x24] sm:$0xf]
        %v1140 = vld [vmem:[%s1129 + $0x28] sm:$0xf]
        %v1141 = vld [vmem:[%s1129 + $0x2c] sm:$0xf]
        %v1142 = vld [vmem:[%s1129 + $0x30] sm:$0xf]
        %v1143 = vld [vmem:[%s1129 + $0x34] sm:$0xf]
        %v1144 = vld [vmem:[%s1129 + $0x38] sm:$0xf]
        %v1145 = vld [vmem:[%s1129 + $0x3c] sm:$0xf]
        %v1146 = vld [vmem:[%s1129 + $0x40] sm:$0xf]
        %v1147 = vld [vmem:[%s1129 + $0x44] sm:$0xf]
        %v1148 = vld [vmem:[%s1129 + $0x48] sm:$0xf]
        %v1149 = vld [vmem:[%s1129 + $0x4c] sm:$0xf]
        %v1150 = vld [vmem:[%s1129 + $0x50] sm:$0xf]
        %v1151 = vld [vmem:[%s1129 + $0x54] sm:$0xf]
        %v1152 = vld [vmem:[%s1129 + $0x58] sm:$0xf]
        %v1153 = vld [vmem:[%s1129 + $0x5c] sm:$0xf]
        %v1154 = vld [vmem:[%s1129 + $0x60] sm:$0xf]
        %v1155 = vld [vmem:[%s1129 + $0x64] sm:$0xf]
        %v1156 = vld [vmem:[%s1129 + $0x68] sm:$0xf]
        %v1157 = vld [vmem:[%s1129 + $0x6c] sm:$0xf]
        %v1158 = vld [vmem:[%s1129 + $0x70] sm:$0xf]
        %v1159 = vld [vmem:[%s1129 + $0x74] sm:$0xf]
        %v1160 = vld [vmem:[%s1129 + $0x78] sm:$0xf]
        %v1161 = vld [vmem:[%s1129 + $0x7c] sm:$0xf]
        %v1162 = vld [vmem:[%s1129 + $0x80] sm:$0xf]
        %v1163 = vld [vmem:[%s1129 + $0x84] sm:$0xf]
        %v1164 = vld [vmem:[%s1129 + $0x88] sm:$0xf]
        %v1165 = vld [vmem:[%s1129 + $0x8c] sm:$0xf]
        %v1166 = vld [vmem:[%s1129 + $0x90] sm:$0xf]
        %v1167 = vld [vmem:[%s1129 + $0x94] sm:$0xf]
        %v1168 = vld [vmem:[%s1129 + $0x98] sm:$0xf]
        %v1169 = vld [vmem:[%s1129 + $0x9c] sm:$0xf]
        %v1170 = vld [vmem:[%s1129 + $0xa0] sm:$0xf]
        %v1171 = vld [vmem:[%s1129 + $0xa4] sm:$0xf]
        %v1172 = vld [vmem:[%s1129 + $0xa8] sm:$0xf]
        %v1173 = vld [vmem:[%s1129 + $0xac] sm:$0xf]
        %v1174 = vld [vmem:[%s1129 + $0xb0] sm:$0xf]
        %v1175 = vld [vmem:[%s1129 + $0xb4] sm:$0xf]
        %v1176 = vld [vmem:[%s1129 + $0xb8] sm:$0xf]
        %v1177 = vld [vmem:[%s1129 + $0xbc] sm:$0xf]
        %vm1178 = vcmask 1044480
        %v1179 = vrot.slane %v530, 3
        %v1180 = vrot.slane %v531, 3
        %v1181 = vsel %vm1178, %v1179, %v1180
        %v1182 = vrot.slane %v1113, 3
        %v1183 = vrot.slane %v1116, 3
        %v1184 = vsel %vm1178, %v1182, %v1183
        %v1185 = vrot.slane %v1124, 3
        %v1186 = vrot.slane %v1126, 3
        %v1187 = vsel %vm1178, %v1185, %v1186
        %v1188 = vrot.slane %v532, 3
        %v1189 = vsel %vm1178, %v1180, %v1188
        %v1190 = vrot.slane %v1119, 3
        %v1191 = vsel %vm1178, %v1183, %v1190
        %v1192 = vrot.slane %v1128, 3
        %v1193 = vsel %vm1178, %v1186, %v1192
        %v1251 = vunpack.c.l.b16 %v1130
        %v1252 = vunpack.c.l.b16 %v1131
        %v1253 = vunpack.c.l.b16 %v1132
        %v1254 = vunpack.c.l.b16 %v1133
        %v1255 = vunpack.c.l.b16 %v1134
        %v1256 = vunpack.c.l.b16 %v1135
        %v1257 = vunpack.c.l.b16 %v1136
        %v1258 = vunpack.c.l.b16 %v1137
        %v1259 = vunpack.c.l.b16 %v1138
        %v1260 = vunpack.c.l.b16 %v1139
        %v1261 = vunpack.c.l.b16 %v1140
        %v1262 = vunpack.c.l.b16 %v1141
        %v1263 = vunpack.c.l.b16 %v1142
        %v1264 = vunpack.c.l.b16 %v1143
        %v1265 = vunpack.c.l.b16 %v1144
        %v1266 = vunpack.c.l.b16 %v1145
        %v1267 = vunpack.c.l.b16 %v1146
        %v1268 = vunpack.c.l.b16 %v1147
        %v1269 = vunpack.c.l.b16 %v1148
        %v1270 = vunpack.c.l.b16 %v1149
        %v1271 = vunpack.c.l.b16 %v1150
        %v1272 = vunpack.c.l.b16 %v1151
        %v1273 = vunpack.c.l.b16 %v1152
        %v1274 = vunpack.c.l.b16 %v1153
        %v1275 = vunpack.c.l.b16 %v1154
        %v1276 = vunpack.c.l.b16 %v1155
        %v1277 = vunpack.c.l.b16 %v1156
        %v1278 = vunpack.c.l.b16 %v1157
        %v1279 = vunpack.c.l.b16 %v1158
        %v1280 = vunpack.c.l.b16 %v1159
        %v1281 = vunpack.c.l.b16 %v1160
        %v1282 = vunpack.c.l.b16 %v1161
        %v1283 = vunpack.c.l.b16 %v1162
        %v1284 = vunpack.c.l.b16 %v1163
        %v1285 = vunpack.c.l.b16 %v1164
        %v1286 = vunpack.c.l.b16 %v1165
        %v1287 = vunpack.c.l.b16 %v1166
        %v1288 = vunpack.c.l.b16 %v1167
        %v1289 = vunpack.c.l.b16 %v1168
        %v1290 = vunpack.c.l.b16 %v1169
        %v1291 = vunpack.c.l.b16 %v1170
        %v1292 = vunpack.c.l.b16 %v1171
        %v1293 = vunpack.c.l.b16 %v1172
        %v1294 = vunpack.c.l.b16 %v1173
        %v1295 = vunpack.c.l.b16 %v1174
        %v1296 = vunpack.c.l.b16 %v1175
        %v1297 = vunpack.c.l.b16 %v1176
        %v1298 = vunpack.c.l.b16 %v1177
        %v1299 = vpack.c.b16 %v1252, %v1251
        %v1300 = vpack.c.b16 %v1254, %v1253
        %v1301 = vpack.c.b16 %v1256, %v1255
        %v1302 = vpack.c.b16 %v1258, %v1257
        %v1303 = vpack.c.b16 %v1260, %v1259
        %v1304 = vpack.c.b16 %v1262, %v1261
        %v1305 = vpack.c.b16 %v1264, %v1263
        %v1306 = vpack.c.b16 %v1266, %v1265
        %v1307 = vpack.c.b16 %v1268, %v1267
        %v1308 = vpack.c.b16 %v1270, %v1269
        %v1309 = vpack.c.b16 %v1272, %v1271
        %v1310 = vpack.c.b16 %v1274, %v1273
        %v1311 = vpack.c.b16 %v1276, %v1275
        %v1312 = vpack.c.b16 %v1278, %v1277
        %v1313 = vpack.c.b16 %v1280, %v1279
        %v1314 = vpack.c.b16 %v1282, %v1281
        %v1315 = vpack.c.b16 %v1284, %v1283
        %v1316 = vpack.c.b16 %v1286, %v1285
        %v1317 = vpack.c.b16 %v1288, %v1287
        %v1318 = vpack.c.b16 %v1290, %v1289
        %v1319 = vpack.c.b16 %v1292, %v1291
        %v1320 = vpack.c.b16 %v1294, %v1293
        %v1321 = vpack.c.b16 %v1296, %v1295
        %v1322 = vpack.c.b16 %v1298, %v1297
        %1347 = vmatpush.bf16.msra.mxu0 %v1306
        %1348 = vmatpush.bf16.msra.mxu0 %v1305
        %1349 = vmatpush.bf16.msra.mxu0 %v1304
        %1350 = vmatpush.bf16.msra.mxu0 %v1303
        %1351 = vmatpush.bf16.msra.mxu0 %v1302
        %1352 = vmatpush.bf16.msra.mxu0 %v1301
        %1353 = vmatpush.bf16.msra.mxu0 %v1300
        %1354 = vmatpush.bf16.msra.mxu0 %v1299
        %1355 = vmatmul.bf16.gmra.mxu0 %v1181
        %v1356 = vpop.f32.mrf.mxu0
        %v1357 = vadd.f32 0.0, %v1356
        %v1358 = vpop.f32.mrf.mxu0
        %v1359 = vadd.f32 0.0, %v1358
        %1360 = vmatmul.bf16.gmra.mxu0 %v1189
        %v1361 = vpop.f32.mrf.mxu0
        %v1362 = vadd.f32 0.0, %v1361
        %v1363 = vpop.f32.mrf.mxu0
        %v1364 = vadd.f32 0.0, %v1363
        %1365 = vmatmul.bf16.gmra.mxu0 %v1188
        %v1366 = vpop.f32.mrf.mxu0
        %v1367 = vadd.f32 0.0, %v1366
        %v1368 = vpop.f32.mrf.mxu0
        %1369 = vdwg.mxu0
        %1370 = vmatpush.bf16.msra.mxu0 %v1314
        %1371 = vmatpush.bf16.msra.mxu0 %v1313
        %1372 = vmatpush.bf16.msra.mxu0 %v1312
        %1373 = vmatpush.bf16.msra.mxu0 %v1311
        %1374 = vmatpush.bf16.msra.mxu0 %v1310
        %1375 = vmatpush.bf16.msra.mxu0 %v1309
        %1376 = vmatpush.bf16.msra.mxu0 %v1308
        %1377 = vmatpush.bf16.msra.mxu0 %v1307
        %1378 = vmatmul.bf16.gmra.mxu0 %v1184
        %v1379 = vpop.f32.mrf.mxu0
        %v1380 = vadd.f32 %v1357, %v1379
        %v1381 = vpop.f32.mrf.mxu0
        %v1382 = vadd.f32 %v1359, %v1381
        %1383 = vmatmul.bf16.gmra.mxu0 %v1191
        %v1384 = vpop.f32.mrf.mxu0
        %v1385 = vadd.f32 %v1362, %v1384
        %v1386 = vpop.f32.mrf.mxu0
        %v1387 = vadd.f32 %v1364, %v1386
        %1388 = vmatmul.bf16.gmra.mxu0 %v1190
        %v1389 = vpop.f32.mrf.mxu0
        %v1390 = vadd.f32 %v1367, %v1389
        %v1391 = vpop.f32.mrf.mxu0
        %1392 = vdwg.mxu0
        %1393 = vmatpush.bf16.msra.mxu0 %v1322
        %1394 = vmatpush.bf16.msra.mxu0 %v1321
        %1395 = vmatpush.bf16.msra.mxu0 %v1320
        %1396 = vmatpush.bf16.msra.mxu0 %v1319
        %1397 = vmatpush.bf16.msra.mxu0 %v1318
        %1398 = vmatpush.bf16.msra.mxu0 %v1317
        %1399 = vmatpush.bf16.msra.mxu0 %v1316
        %1400 = vmatpush.bf16.msra.mxu0 %v1315
        %1401 = vmatmul.bf16.gmra.mxu0 %v1187
        %v1402 = vpop.f32.mrf.mxu0
        %v1403 = vadd.f32 %v1380, %v1402
        %v1404 = vpop.f32.mrf.mxu0
        %v1405 = vadd.f32 %v1382, %v1404
        %1406 = vmatmul.bf16.gmra.mxu0 %v1193
        %v1407 = vpop.f32.mrf.mxu0
        %v1408 = vadd.f32 %v1385, %v1407
        %v1409 = vpop.f32.mrf.mxu0
        %v1410 = vadd.f32 %v1387, %v1409
        %1411 = vmatmul.bf16.gmra.mxu0 %v1192
        %v1412 = vpop.f32.mrf.mxu0
        %v1413 = vadd.f32 %v1390, %v1412
        %v1414 = vpop.f32.mrf.mxu0
        %1415 = vdwg.mxu0
        %v1416 = vadd.f32 %v1097, %v1403
        %v1417 = vadd.f32 %v1099, %v1405
        %v1418 = vadd.f32 %v1102, %v1408
        %v1419 = vadd.f32 %v1104, %v1410
        %v1420 = vadd.f32 %v1107, %v1413
        %v1421 = vld [vmem:[%s4] sm:$0x1]
        %v1423 = vperm.slane %v1421, 0
        %v1425 = vadd.f32 %v1416, %v1423
        %v1426 = vadd.f32 %v1417, %v1423
        %v1427 = vadd.f32 %v1418, %v1423
        %v1428 = vadd.f32 %v1419, %v1423
        %v1429 = vadd.f32 %v1420, %v1423
        %v1430 = vmax.f32 %v1425, 0.0
        %v1431 = vmax.f32 %v1426, 0.0
        %v1432 = vmax.f32 %v1427, 0.0
        %v1433 = vmax.f32 %v1428, 0.0
        %v1434 = vmax.f32 %v1429, 0.0
        %v1435 = vpack.c.bf16 %v1430, %v1430
        %v1436 = vpack.c.bf16 %v1431, %v1431
        %v1437 = vpack.c.bf16 %v1432, %v1432
        %v1438 = vpack.c.bf16 %v1433, %v1433
        %v1439 = vpack.c.bf16 %v1434, %v1434
        %v1443 = vunpack.c.l.b16 %v1435
        %v1444 = vunpack.c.l.b16 %v1436
        %v1445 = vunpack.c.l.b16 %v1437
        %v1446 = vpack.c.b16 %v1444, %v1443
        %v1447 = vpack.c.b16 %v1445, %v1445
        %v1451 = vshrl.u32 %v1446, 16
        %v1453 = vshll.u32 %v1446, 16
        %v1455 = vrot.slane %v1453, 1
        %v1456 = vor.u32 %v1451, %v1455
        %v1458 = vshll.u32 %v1447, 16
        %v1460 = vrot.slane %v1458, 1
        %v1461 = vsel %vm445, %v1456, %v1460
        %v1462 = vshrl.u32 %v1447, 16
        %v1466 = vrot.slane %v1446, 1
        %v1467 = vrot.slane %v1447, 1
        %v1468 = vsel %vm471, %v1466, %v1467
        %v1471 = vld [vmem:[#allocation4] sm:$0xf]
        %v1472 = vld [vmem:[#allocation4 + $0x4] sm:$0xf]
        %v1473 = vld [vmem:[#allocation4 + $0x8] sm:$0xf]
        %v1474 = vld [vmem:[#allocation4 + $0xc] sm:$0xf]
        %v1475 = vld [vmem:[#allocation4 + $0x10] sm:$0xf]
        %v1476 = vld [vmem:[#allocation4 + $0x14] sm:$0xf]
        %v1477 = vld [vmem:[#allocation4 + $0x18] sm:$0xf]
        %v1478 = vld [vmem:[#allocation4 + $0x1c] sm:$0xf]
        %v1479 = vld [vmem:[#allocation4 + $0x20] sm:$0xf]
        %v1480 = vld [vmem:[#allocation4 + $0x24] sm:$0xf]
        %v1481 = vld [vmem:[#allocation4 + $0x28] sm:$0xf]
        %v1482 = vld [vmem:[#allocation4 + $0x2c] sm:$0xf]
        %v1483 = vld [vmem:[#allocation4 + $0x30] sm:$0xf]
        %v1484 = vld [vmem:[#allocation4 + $0x34] sm:$0xf]
        %v1485 = vld [vmem:[#allocation4 + $0x38] sm:$0xf]
        %v1486 = vld [vmem:[#allocation4 + $0x3c] sm:$0xf]
        %v1487 = vld [vmem:[#allocation4 + $0x40] sm:$0xf]
        %v1488 = vld [vmem:[#allocation4 + $0x44] sm:$0xf]
        %v1489 = vld [vmem:[#allocation4 + $0x48] sm:$0xf]
        %v1490 = vld [vmem:[#allocation4 + $0x4c] sm:$0xf]
        %v1491 = vld [vmem:[#allocation4 + $0x50] sm:$0xf]
        %v1492 = vld [vmem:[#allocation4 + $0x54] sm:$0xf]
        %v1493 = vld [vmem:[#allocation4 + $0x58] sm:$0xf]
        %v1494 = vld [vmem:[#allocation4 + $0x5c] sm:$0xf]
        %v1495 = vld [vmem:[#allocation4 + $0x60] sm:$0xf]
        %v1496 = vld [vmem:[#allocation4 + $0x64] sm:$0xf]
        %v1497 = vld [vmem:[#allocation4 + $0x68] sm:$0xf]
        %v1498 = vld [vmem:[#allocation4 + $0x6c] sm:$0xf]
        %v1499 = vld [vmem:[#allocation4 + $0x70] sm:$0xf]
        %v1500 = vld [vmem:[#allocation4 + $0x74] sm:$0xf]
        %v1501 = vld [vmem:[#allocation4 + $0x78] sm:$0xf]
        %v1502 = vld [vmem:[#allocation4 + $0x7c] sm:$0xf]
        %v1503 = vld [vmem:[#allocation4 + $0x80] sm:$0xf]
        %v1504 = vld [vmem:[#allocation4 + $0x84] sm:$0xf]
        %v1505 = vld [vmem:[#allocation4 + $0x88] sm:$0xf]
        %v1506 = vld [vmem:[#allocation4 + $0x8c] sm:$0xf]
        %v1507 = vld [vmem:[#allocation4 + $0x90] sm:$0xf]
        %v1508 = vld [vmem:[#allocation4 + $0x94] sm:$0xf]
        %v1509 = vld [vmem:[#allocation4 + $0x98] sm:$0xf]
        %v1510 = vld [vmem:[#allocation4 + $0x9c] sm:$0xf]
        %v1511 = vld [vmem:[#allocation4 + $0xa0] sm:$0xf]
        %v1512 = vld [vmem:[#allocation4 + $0xa4] sm:$0xf]
        %v1513 = vld [vmem:[#allocation4 + $0xa8] sm:$0xf]
        %v1514 = vld [vmem:[#allocation4 + $0xac] sm:$0xf]
        %v1515 = vld [vmem:[#allocation4 + $0xb0] sm:$0xf]
        %v1516 = vld [vmem:[#allocation4 + $0xb4] sm:$0xf]
        %v1517 = vld [vmem:[#allocation4 + $0xb8] sm:$0xf]
        %v1518 = vld [vmem:[#allocation4 + $0xbc] sm:$0xf]
        %v1520 = vunpack.c.l.b16 %v1438
        %v1521 = vpack.c.b16 %v1445, %v1444
        %v1522 = vpack.c.b16 %v1520, %v1520
        %v1524 = vshrl.u32 %v1521, 16
        %v1526 = vrot.slane %v1524, 4
        %v1527 = vshll.u32 %v1521, 16
        %v1529 = vrot.slane %v1527, 5
        %v1530 = vor.u32 %v1526, %v1529
        %v1532 = vshll.u32 %v1522, 16
        %v1534 = vrot.slane %v1532, 5
        %v1535 = vsel %vm533, %v1530, %v1534
        %v1536 = vrot.slane %v1521, 5
        %v1537 = vrot.slane %v1522, 5
        %v1538 = vsel %vm556, %v1536, %v1537
        %s1539 = scalar_lea.vmem [#allocation4], 192
        %v1540 = vld [vmem:[%s1539] sm:$0xf]
        %v1541 = vld [vmem:[%s1539 + $0x4] sm:$0xf]
        %v1542 = vld [vmem:[%s1539 + $0x8] sm:$0xf]
        %v1543 = vld [vmem:[%s1539 + $0xc] sm:$0xf]
        %v1544 = vld [vmem:[%s1539 + $0x10] sm:$0xf]
        %v1545 = vld [vmem:[%s1539 + $0x14] sm:$0xf]
        %v1546 = vld [vmem:[%s1539 + $0x18] sm:$0xf]
        %v1547 = vld [vmem:[%s1539 + $0x1c] sm:$0xf]
        %v1548 = vld [vmem:[%s1539 + $0x20] sm:$0xf]
        %v1549 = vld [vmem:[%s1539 + $0x24] sm:$0xf]
        %v1550 = vld [vmem:[%s1539 + $0x28] sm:$0xf]
        %v1551 = vld [vmem:[%s1539 + $0x2c] sm:$0xf]
        %v1552 = vld [vmem:[%s1539 + $0x30] sm:$0xf]
        %v1553 = vld [vmem:[%s1539 + $0x34] sm:$0xf]
        %v1554 = vld [vmem:[%s1539 + $0x38] sm:$0xf]
        %v1555 = vld [vmem:[%s1539 + $0x3c] sm:$0xf]
        %v1556 = vld [vmem:[%s1539 + $0x40] sm:$0xf]
        %v1557 = vld [vmem:[%s1539 + $0x44] sm:$0xf]
        %v1558 = vld [vmem:[%s1539 + $0x48] sm:$0xf]
        %v1559 = vld [vmem:[%s1539 + $0x4c] sm:$0xf]
        %v1560 = vld [vmem:[%s1539 + $0x50] sm:$0xf]
        %v1561 = vld [vmem:[%s1539 + $0x54] sm:$0xf]
        %v1562 = vld [vmem:[%s1539 + $0x58] sm:$0xf]
        %v1563 = vld [vmem:[%s1539 + $0x5c] sm:$0xf]
        %v1564 = vld [vmem:[%s1539 + $0x60] sm:$0xf]
        %v1565 = vld [vmem:[%s1539 + $0x64] sm:$0xf]
        %v1566 = vld [vmem:[%s1539 + $0x68] sm:$0xf]
        %v1567 = vld [vmem:[%s1539 + $0x6c] sm:$0xf]
        %v1568 = vld [vmem:[%s1539 + $0x70] sm:$0xf]
        %v1569 = vld [vmem:[%s1539 + $0x74] sm:$0xf]
        %v1570 = vld [vmem:[%s1539 + $0x78] sm:$0xf]
        %v1571 = vld [vmem:[%s1539 + $0x7c] sm:$0xf]
        %v1572 = vld [vmem:[%s1539 + $0x80] sm:$0xf]
        %v1573 = vld [vmem:[%s1539 + $0x84] sm:$0xf]
        %v1574 = vld [vmem:[%s1539 + $0x88] sm:$0xf]
        %v1575 = vld [vmem:[%s1539 + $0x8c] sm:$0xf]
        %v1576 = vld [vmem:[%s1539 + $0x90] sm:$0xf]
        %v1577 = vld [vmem:[%s1539 + $0x94] sm:$0xf]
        %v1578 = vld [vmem:[%s1539 + $0x98] sm:$0xf]
        %v1579 = vld [vmem:[%s1539 + $0x9c] sm:$0xf]
        %v1580 = vld [vmem:[%s1539 + $0xa0] sm:$0xf]
        %v1581 = vld [vmem:[%s1539 + $0xa4] sm:$0xf]
        %v1582 = vld [vmem:[%s1539 + $0xa8] sm:$0xf]
        %v1583 = vld [vmem:[%s1539 + $0xac] sm:$0xf]
        %v1584 = vld [vmem:[%s1539 + $0xb0] sm:$0xf]
        %v1585 = vld [vmem:[%s1539 + $0xb4] sm:$0xf]
        %v1586 = vld [vmem:[%s1539 + $0xb8] sm:$0xf]
        %v1587 = vld [vmem:[%s1539 + $0xbc] sm:$0xf]
        %v1588 = vrot.slane %v1451, 3
        %v1589 = vrot.slane %v1453, 4
        %v1590 = vor.u32 %v1588, %v1589
        %v1591 = vrot.slane %v1462, 3
        %v1592 = vrot.slane %v1458, 4
        %v1593 = vor.u32 %v1591, %v1592
        %v1594 = vsel %vm611, %v1590, %v1593
        %v1596 = vshrl.u32 %v1530, 16
        %v1598 = vrot.slane %v1596, 3
        %v1599 = vshll.u32 %v1530, 16
        %v1601 = vrot.slane %v1599, 4
        %v1602 = vor.u32 %v1598, %v1601
        %v1604 = vshrl.u32 %v1535, 16
        %v1606 = vrot.slane %v1604, 3
        %v1607 = vshll.u32 %v1535, 16
        %v1609 = vrot.slane %v1607, 4
        %v1610 = vor.u32 %v1606, %v1609
        %v1611 = vsel %vm611, %v1602, %v1610
        %v1613 = vshrl.u32 %v1536, 16
        %v1615 = vrot.slane %v1613, 3
        %v1616 = vshll.u32 %v1536, 16
        %v1618 = vrot.slane %v1616, 4
        %v1619 = vor.u32 %v1615, %v1618
        %v1621 = vshrl.u32 %v1538, 16
        %v1623 = vrot.slane %v1621, 3
        %v1624 = vshll.u32 %v1538, 16
        %v1626 = vrot.slane %v1624, 4
        %v1627 = vor.u32 %v1623, %v1626
        %v1628 = vsel %vm611, %v1619, %v1627
        %v1683 = vunpack.c.l.b16 %v1540
        %v1684 = vunpack.c.l.b16 %v1541
        %v1685 = vunpack.c.l.b16 %v1542
        %v1686 = vunpack.c.l.b16 %v1543
        %v1687 = vunpack.c.l.b16 %v1544
        %v1688 = vunpack.c.l.b16 %v1545
        %v1689 = vunpack.c.l.b16 %v1546
        %v1690 = vunpack.c.l.b16 %v1547
        %v1691 = vunpack.c.l.b16 %v1548
        %v1692 = vunpack.c.l.b16 %v1549
        %v1693 = vunpack.c.l.b16 %v1550
        %v1694 = vunpack.c.l.b16 %v1551
        %v1695 = vunpack.c.l.b16 %v1552
        %v1696 = vunpack.c.l.b16 %v1553
        %v1697 = vunpack.c.l.b16 %v1554
        %v1698 = vunpack.c.l.b16 %v1555
        %v1699 = vunpack.c.l.b16 %v1556
        %v1700 = vunpack.c.l.b16 %v1557
        %v1701 = vunpack.c.l.b16 %v1558
        %v1702 = vunpack.c.l.b16 %v1559
        %v1703 = vunpack.c.l.b16 %v1560
        %v1704 = vunpack.c.l.b16 %v1561
        %v1705 = vunpack.c.l.b16 %v1562
        %v1706 = vunpack.c.l.b16 %v1563
        %v1707 = vunpack.c.l.b16 %v1564
        %v1708 = vunpack.c.l.b16 %v1565
        %v1709 = vunpack.c.l.b16 %v1566
        %v1710 = vunpack.c.l.b16 %v1567
        %v1711 = vunpack.c.l.b16 %v1568
        %v1712 = vunpack.c.l.b16 %v1569
        %v1713 = vunpack.c.l.b16 %v1570
        %v1714 = vunpack.c.l.b16 %v1571
        %v1715 = vunpack.c.l.b16 %v1572
        %v1716 = vunpack.c.l.b16 %v1573
        %v1717 = vunpack.c.l.b16 %v1574
        %v1718 = vunpack.c.l.b16 %v1575
        %v1719 = vunpack.c.l.b16 %v1576
        %v1720 = vunpack.c.l.b16 %v1577
        %v1721 = vunpack.c.l.b16 %v1578
        %v1722 = vunpack.c.l.b16 %v1579
        %v1723 = vunpack.c.l.b16 %v1580
        %v1724 = vunpack.c.l.b16 %v1581
        %v1725 = vunpack.c.l.b16 %v1582
        %v1726 = vunpack.c.l.b16 %v1583
        %v1727 = vunpack.c.l.b16 %v1584
        %v1728 = vunpack.c.l.b16 %v1585
        %v1729 = vunpack.c.l.b16 %v1586
        %v1730 = vunpack.c.l.b16 %v1587
        %v1731 = vpack.c.b16 %v1684, %v1683
        %v1732 = vpack.c.b16 %v1686, %v1685
        %v1733 = vpack.c.b16 %v1688, %v1687
        %v1734 = vpack.c.b16 %v1690, %v1689
        %v1735 = vpack.c.b16 %v1692, %v1691
        %v1736 = vpack.c.b16 %v1694, %v1693
        %v1737 = vpack.c.b16 %v1696, %v1695
        %v1738 = vpack.c.b16 %v1698, %v1697
        %v1739 = vpack.c.b16 %v1700, %v1699
        %v1740 = vpack.c.b16 %v1702, %v1701
        %v1741 = vpack.c.b16 %v1704, %v1703
        %v1742 = vpack.c.b16 %v1706, %v1705
        %v1743 = vpack.c.b16 %v1708, %v1707
        %v1744 = vpack.c.b16 %v1710, %v1709
        %v1745 = vpack.c.b16 %v1712, %v1711
        %v1746 = vpack.c.b16 %v1714, %v1713
        %v1747 = vpack.c.b16 %v1716, %v1715
        %v1748 = vpack.c.b16 %v1718, %v1717
        %v1749 = vpack.c.b16 %v1720, %v1719
        %v1750 = vpack.c.b16 %v1722, %v1721
        %v1751 = vpack.c.b16 %v1724, %v1723
        %v1752 = vpack.c.b16 %v1726, %v1725
        %v1753 = vpack.c.b16 %v1728, %v1727
        %v1754 = vpack.c.b16 %v1730, %v1729
        %1779 = vmatpush.bf16.msra.mxu0 %v1738
        %1780 = vmatpush.bf16.msra.mxu0 %v1737
        %1781 = vmatpush.bf16.msra.mxu0 %v1736
        %1782 = vmatpush.bf16.msra.mxu0 %v1735
        %1783 = vmatpush.bf16.msra.mxu0 %v1734
        %1784 = vmatpush.bf16.msra.mxu0 %v1733
        %1785 = vmatpush.bf16.msra.mxu0 %v1732
        %1786 = vmatpush.bf16.msra.mxu0 %v1731
        %1787 = vmatmul.bf16.gmra.mxu0 %v1594
        %v1788 = vpop.f32.mrf.mxu0
        %v1789 = vadd.f32 0.0, %v1788
        %v1790 = vpop.f32.mrf.mxu0
        %v1791 = vadd.f32 0.0, %v1790
        %1792 = vmatmul.bf16.gmra.mxu0 %v1591
        %v1793 = vpop.f32.mrf.mxu0
        %v1794 = vadd.f32 0.0, %v1793
        %v1795 = vpop.f32.mrf.mxu0
        %1796 = vdwg.mxu0
        %1797 = vmatpush.bf16.msra.mxu0 %v1746
        %1798 = vmatpush.bf16.msra.mxu0 %v1745
        %1799 = vmatpush.bf16.msra.mxu0 %v1744
        %1800 = vmatpush.bf16.msra.mxu0 %v1743
        %1801 = vmatpush.bf16.msra.mxu0 %v1742
        %1802 = vmatpush.bf16.msra.mxu0 %v1741
        %1803 = vmatpush.bf16.msra.mxu0 %v1740
        %1804 = vmatpush.bf16.msra.mxu0 %v1739
        %1805 = vmatmul.bf16.gmra.mxu0 %v1611
        %v1806 = vpop.f32.mrf.mxu0
        %v1807 = vadd.f32 %v1789, %v1806
        %v1808 = vpop.f32.mrf.mxu0
        %v1809 = vadd.f32 %v1791, %v1808
        %1810 = vmatmul.bf16.gmra.mxu0 %v1606
        %v1811 = vpop.f32.mrf.mxu0
        %v1812 = vadd.f32 %v1794, %v1811
        %v1813 = vpop.f32.mrf.mxu0
        %1814 = vdwg.mxu0
        %1815 = vmatpush.bf16.msra.mxu0 %v1754
        %1816 = vmatpush.bf16.msra.mxu0 %v1753
        %1817 = vmatpush.bf16.msra.mxu0 %v1752
        %1818 = vmatpush.bf16.msra.mxu0 %v1751
        %1819 = vmatpush.bf16.msra.mxu0 %v1750
        %1820 = vmatpush.bf16.msra.mxu0 %v1749
        %1821 = vmatpush.bf16.msra.mxu0 %v1748
        %1822 = vmatpush.bf16.msra.mxu0 %v1747
        %1823 = vmatmul.bf16.gmra.mxu0 %v1628
        %v1824 = vpop.f32.mrf.mxu0
        %v1825 = vadd.f32 %v1807, %v1824
        %v1826 = vpop.f32.mrf.mxu0
        %v1827 = vadd.f32 %v1809, %v1826
        %1828 = vmatmul.bf16.gmra.mxu0 %v1623
        %v1829 = vpop.f32.mrf.mxu0
        %v1830 = vadd.f32 %v1812, %v1829
        %v1831 = vpop.f32.mrf.mxu0
        %1832 = vdwg.mxu0
        %v1881 = vunpack.c.l.b16 %v1471
        %v1882 = vunpack.c.l.b16 %v1472
        %v1883 = vunpack.c.l.b16 %v1473
        %v1884 = vunpack.c.l.b16 %v1474
        %v1885 = vunpack.c.l.b16 %v1475
        %v1886 = vunpack.c.l.b16 %v1476
        %v1887 = vunpack.c.l.b16 %v1477
        %v1888 = vunpack.c.l.b16 %v1478
        %v1889 = vunpack.c.l.b16 %v1479
        %v1890 = vunpack.c.l.b16 %v1480
        %v1891 = vunpack.c.l.b16 %v1481
        %v1892 = vunpack.c.l.b16 %v1482
        %v1893 = vunpack.c.l.b16 %v1483
        %v1894 = vunpack.c.l.b16 %v1484
        %v1895 = vunpack.c.l.b16 %v1485
        %v1896 = vunpack.c.l.b16 %v1486
        %v1897 = vunpack.c.l.b16 %v1487
        %v1898 = vunpack.c.l.b16 %v1488
        %v1899 = vunpack.c.l.b16 %v1489
        %v1900 = vunpack.c.l.b16 %v1490
        %v1901 = vunpack.c.l.b16 %v1491
        %v1902 = vunpack.c.l.b16 %v1492
        %v1903 = vunpack.c.l.b16 %v1493
        %v1904 = vunpack.c.l.b16 %v1494
        %v1905 = vunpack.c.l.b16 %v1495
        %v1906 = vunpack.c.l.b16 %v1496
        %v1907 = vunpack.c.l.b16 %v1497
        %v1908 = vunpack.c.l.b16 %v1498
        %v1909 = vunpack.c.l.b16 %v1499
        %v1910 = vunpack.c.l.b16 %v1500
        %v1911 = vunpack.c.l.b16 %v1501
        %v1912 = vunpack.c.l.b16 %v1502
        %v1913 = vunpack.c.l.b16 %v1503
        %v1914 = vunpack.c.l.b16 %v1504
        %v1915 = vunpack.c.l.b16 %v1505
        %v1916 = vunpack.c.l.b16 %v1506
        %v1917 = vunpack.c.l.b16 %v1507
        %v1918 = vunpack.c.l.b16 %v1508
        %v1919 = vunpack.c.l.b16 %v1509
        %v1920 = vunpack.c.l.b16 %v1510
        %v1921 = vunpack.c.l.b16 %v1511
        %v1922 = vunpack.c.l.b16 %v1512
        %v1923 = vunpack.c.l.b16 %v1513
        %v1924 = vunpack.c.l.b16 %v1514
        %v1925 = vunpack.c.l.b16 %v1515
        %v1926 = vunpack.c.l.b16 %v1516
        %v1927 = vunpack.c.l.b16 %v1517
        %v1928 = vunpack.c.l.b16 %v1518
        %v1929 = vpack.c.b16 %v1882, %v1881
        %v1930 = vpack.c.b16 %v1884, %v1883
        %v1931 = vpack.c.b16 %v1886, %v1885
        %v1932 = vpack.c.b16 %v1888, %v1887
        %v1933 = vpack.c.b16 %v1890, %v1889
        %v1934 = vpack.c.b16 %v1892, %v1891
        %v1935 = vpack.c.b16 %v1894, %v1893
        %v1936 = vpack.c.b16 %v1896, %v1895
        %v1937 = vpack.c.b16 %v1898, %v1897
        %v1938 = vpack.c.b16 %v1900, %v1899
        %v1939 = vpack.c.b16 %v1902, %v1901
        %v1940 = vpack.c.b16 %v1904, %v1903
        %v1941 = vpack.c.b16 %v1906, %v1905
        %v1942 = vpack.c.b16 %v1908, %v1907
        %v1943 = vpack.c.b16 %v1910, %v1909
        %v1944 = vpack.c.b16 %v1912, %v1911
        %v1945 = vpack.c.b16 %v1914, %v1913
        %v1946 = vpack.c.b16 %v1916, %v1915
        %v1947 = vpack.c.b16 %v1918, %v1917
        %v1948 = vpack.c.b16 %v1920, %v1919
        %v1949 = vpack.c.b16 %v1922, %v1921
        %v1950 = vpack.c.b16 %v1924, %v1923
        %v1951 = vpack.c.b16 %v1926, %v1925
        %v1952 = vpack.c.b16 %v1928, %v1927
        %1977 = vmatpush.bf16.msra.mxu0 %v1936
        %1978 = vmatpush.bf16.msra.mxu0 %v1935
        %1979 = vmatpush.bf16.msra.mxu0 %v1934
        %1980 = vmatpush.bf16.msra.mxu0 %v1933
        %1981 = vmatpush.bf16.msra.mxu0 %v1932
        %1982 = vmatpush.bf16.msra.mxu0 %v1931
        %1983 = vmatpush.bf16.msra.mxu0 %v1930
        %1984 = vmatpush.bf16.msra.mxu0 %v1929
        %1985 = vmatmul.bf16.gmra.mxu0 %v1446
        %v1986 = vpop.f32.mrf.mxu0
        %v1987 = vadd.f32 %v1825, %v1986
        %v1988 = vpop.f32.mrf.mxu0
        %v1989 = vadd.f32 %v1827, %v1988
        %1990 = vmatmul.bf16.gmra.mxu0 %v1447
        %v1991 = vpop.f32.mrf.mxu0
        %v1992 = vadd.f32 %v1830, %v1991
        %v1993 = vpop.f32.mrf.mxu0
        %1994 = vdwg.mxu0
        %1995 = vmatpush.bf16.msra.mxu0 %v1944
        %1996 = vmatpush.bf16.msra.mxu0 %v1943
        %1997 = vmatpush.bf16.msra.mxu0 %v1942
        %1998 = vmatpush.bf16.msra.mxu0 %v1941
        %1999 = vmatpush.bf16.msra.mxu0 %v1940
        %2000 = vmatpush.bf16.msra.mxu0 %v1939
        %2001 = vmatpush.bf16.msra.mxu0 %v1938
        %2002 = vmatpush.bf16.msra.mxu0 %v1937
        %2003 = vmatmul.bf16.gmra.mxu0 %v1461
        %v2004 = vpop.f32.mrf.mxu0
        %v2005 = vadd.f32 %v1987, %v2004
        %v2006 = vpop.f32.mrf.mxu0
        %v2007 = vadd.f32 %v1989, %v2006
        %2008 = vmatmul.bf16.gmra.mxu0 %v1462
        %v2009 = vpop.f32.mrf.mxu0
        %v2010 = vadd.f32 %v1992, %v2009
        %v2011 = vpop.f32.mrf.mxu0
        %2012 = vdwg.mxu0
        %2013 = vmatpush.bf16.msra.mxu0 %v1952
        %2014 = vmatpush.bf16.msra.mxu0 %v1951
        %2015 = vmatpush.bf16.msra.mxu0 %v1950
        %2016 = vmatpush.bf16.msra.mxu0 %v1949
        %2017 = vmatpush.bf16.msra.mxu0 %v1948
        %2018 = vmatpush.bf16.msra.mxu0 %v1947
        %2019 = vmatpush.bf16.msra.mxu0 %v1946
        %2020 = vmatpush.bf16.msra.mxu0 %v1945
        %2021 = vmatmul.bf16.gmra.mxu0 %v1468
        %v2022 = vpop.f32.mrf.mxu0
        %v2023 = vadd.f32 %v2005, %v2022
        %v2024 = vpop.f32.mrf.mxu0
        %v2025 = vadd.f32 %v2007, %v2024
        %2026 = vmatmul.bf16.gmra.mxu0 %v1467
        %v2027 = vpop.f32.mrf.mxu0
        %v2028 = vadd.f32 %v2010, %v2027
        %v2029 = vpop.f32.mrf.mxu0
        %2030 = vdwg.mxu0
        %v2031 = vrot.slane %v1527, 1
        %v2032 = vor.u32 %v1524, %v2031
        %v2033 = vrot.slane %v1532, 1
        %v2034 = vsel %vm445, %v2032, %v2033
        %v2035 = vshrl.u32 %v1522, 16
        %v2037 = vor.u32 %v2035, %v2033
        %v2039 = vunpack.c.l.b16 %v1439
        %v2040 = vpack.c.b16 %v1520, %v1445
        %v2041 = vpack.c.b16 %v2039, %v2039
        %v2042 = vrot.slane %v2040, 5
        %v2043 = vrot.slane %v2041, 5
        %v2044 = vsel %vm556, %v2042, %v2043
        %s2045 = scalar_lea.vmem [#allocation4], 384
        %v2046 = vld [vmem:[%s2045] sm:$0xf]
        %v2047 = vld [vmem:[%s2045 + $0x4] sm:$0xf]
        %v2048 = vld [vmem:[%s2045 + $0x8] sm:$0xf]
        %v2049 = vld [vmem:[%s2045 + $0xc] sm:$0xf]
        %v2050 = vld [vmem:[%s2045 + $0x10] sm:$0xf]
        %v2051 = vld [vmem:[%s2045 + $0x14] sm:$0xf]
        %v2052 = vld [vmem:[%s2045 + $0x18] sm:$0xf]
        %v2053 = vld [vmem:[%s2045 + $0x1c] sm:$0xf]
        %v2054 = vld [vmem:[%s2045 + $0x20] sm:$0xf]
        %v2055 = vld [vmem:[%s2045 + $0x24] sm:$0xf]
        %v2056 = vld [vmem:[%s2045 + $0x28] sm:$0xf]
        %v2057 = vld [vmem:[%s2045 + $0x2c] sm:$0xf]
        %v2058 = vld [vmem:[%s2045 + $0x30] sm:$0xf]
        %v2059 = vld [vmem:[%s2045 + $0x34] sm:$0xf]
        %v2060 = vld [vmem:[%s2045 + $0x38] sm:$0xf]
        %v2061 = vld [vmem:[%s2045 + $0x3c] sm:$0xf]
        %v2062 = vld [vmem:[%s2045 + $0x40] sm:$0xf]
        %v2063 = vld [vmem:[%s2045 + $0x44] sm:$0xf]
        %v2064 = vld [vmem:[%s2045 + $0x48] sm:$0xf]
        %v2065 = vld [vmem:[%s2045 + $0x4c] sm:$0xf]
        %v2066 = vld [vmem:[%s2045 + $0x50] sm:$0xf]
        %v2067 = vld [vmem:[%s2045 + $0x54] sm:$0xf]
        %v2068 = vld [vmem:[%s2045 + $0x58] sm:$0xf]
        %v2069 = vld [vmem:[%s2045 + $0x5c] sm:$0xf]
        %v2070 = vld [vmem:[%s2045 + $0x60] sm:$0xf]
        %v2071 = vld [vmem:[%s2045 + $0x64] sm:$0xf]
        %v2072 = vld [vmem:[%s2045 + $0x68] sm:$0xf]
        %v2073 = vld [vmem:[%s2045 + $0x6c] sm:$0xf]
        %v2074 = vld [vmem:[%s2045 + $0x70] sm:$0xf]
        %v2075 = vld [vmem:[%s2045 + $0x74] sm:$0xf]
        %v2076 = vld [vmem:[%s2045 + $0x78] sm:$0xf]
        %v2077 = vld [vmem:[%s2045 + $0x7c] sm:$0xf]
        %v2078 = vld [vmem:[%s2045 + $0x80] sm:$0xf]
        %v2079 = vld [vmem:[%s2045 + $0x84] sm:$0xf]
        %v2080 = vld [vmem:[%s2045 + $0x88] sm:$0xf]
        %v2081 = vld [vmem:[%s2045 + $0x8c] sm:$0xf]
        %v2082 = vld [vmem:[%s2045 + $0x90] sm:$0xf]
        %v2083 = vld [vmem:[%s2045 + $0x94] sm:$0xf]
        %v2084 = vld [vmem:[%s2045 + $0x98] sm:$0xf]
        %v2085 = vld [vmem:[%s2045 + $0x9c] sm:$0xf]
        %v2086 = vld [vmem:[%s2045 + $0xa0] sm:$0xf]
        %v2087 = vld [vmem:[%s2045 + $0xa4] sm:$0xf]
        %v2088 = vld [vmem:[%s2045 + $0xa8] sm:$0xf]
        %v2089 = vld [vmem:[%s2045 + $0xac] sm:$0xf]
        %v2090 = vld [vmem:[%s2045 + $0xb0] sm:$0xf]
        %v2091 = vld [vmem:[%s2045 + $0xb4] sm:$0xf]
        %v2092 = vld [vmem:[%s2045 + $0xb8] sm:$0xf]
        %v2093 = vld [vmem:[%s2045 + $0xbc] sm:$0xf]
        %v2094 = vrot.slane %v1521, 3
        %v2095 = vrot.slane %v1522, 3
        %v2096 = vsel %vm1178, %v2094, %v2095
        %v2097 = vrot.slane %v2034, 3
        %v2098 = vrot.slane %v2037, 3
        %v2099 = vsel %vm1178, %v2097, %v2098
        %v2100 = vrot.slane %v2042, 3
        %v2101 = vrot.slane %v2044, 3
        %v2102 = vsel %vm1178, %v2100, %v2101
        %v2157 = vunpack.c.l.b16 %v2046
        %v2158 = vunpack.c.l.b16 %v2047
        %v2159 = vunpack.c.l.b16 %v2048
        %v2160 = vunpack.c.l.b16 %v2049
        %v2161 = vunpack.c.l.b16 %v2050
        %v2162 = vunpack.c.l.b16 %v2051
        %v2163 = vunpack.c.l.b16 %v2052
        %v2164 = vunpack.c.l.b16 %v2053
        %v2165 = vunpack.c.l.b16 %v2054
        %v2166 = vunpack.c.l.b16 %v2055
        %v2167 = vunpack.c.l.b16 %v2056
        %v2168 = vunpack.c.l.b16 %v2057
        %v2169 = vunpack.c.l.b16 %v2058
        %v2170 = vunpack.c.l.b16 %v2059
        %v2171 = vunpack.c.l.b16 %v2060
        %v2172 = vunpack.c.l.b16 %v2061
        %v2173 = vunpack.c.l.b16 %v2062
        %v2174 = vunpack.c.l.b16 %v2063
        %v2175 = vunpack.c.l.b16 %v2064
        %v2176 = vunpack.c.l.b16 %v2065
        %v2177 = vunpack.c.l.b16 %v2066
        %v2178 = vunpack.c.l.b16 %v2067
        %v2179 = vunpack.c.l.b16 %v2068
        %v2180 = vunpack.c.l.b16 %v2069
        %v2181 = vunpack.c.l.b16 %v2070
        %v2182 = vunpack.c.l.b16 %v2071
        %v2183 = vunpack.c.l.b16 %v2072
        %v2184 = vunpack.c.l.b16 %v2073
        %v2185 = vunpack.c.l.b16 %v2074
        %v2186 = vunpack.c.l.b16 %v2075
        %v2187 = vunpack.c.l.b16 %v2076
        %v2188 = vunpack.c.l.b16 %v2077
        %v2189 = vunpack.c.l.b16 %v2078
        %v2190 = vunpack.c.l.b16 %v2079
        %v2191 = vunpack.c.l.b16 %v2080
        %v2192 = vunpack.c.l.b16 %v2081
        %v2193 = vunpack.c.l.b16 %v2082
        %v2194 = vunpack.c.l.b16 %v2083
        %v2195 = vunpack.c.l.b16 %v2084
        %v2196 = vunpack.c.l.b16 %v2085
        %v2197 = vunpack.c.l.b16 %v2086
        %v2198 = vunpack.c.l.b16 %v2087
        %v2199 = vunpack.c.l.b16 %v2088
        %v2200 = vunpack.c.l.b16 %v2089
        %v2201 = vunpack.c.l.b16 %v2090
        %v2202 = vunpack.c.l.b16 %v2091
        %v2203 = vunpack.c.l.b16 %v2092
        %v2204 = vunpack.c.l.b16 %v2093
        %v2205 = vpack.c.b16 %v2158, %v2157
        %v2206 = vpack.c.b16 %v2160, %v2159
        %v2207 = vpack.c.b16 %v2162, %v2161
        %v2208 = vpack.c.b16 %v2164, %v2163
        %v2209 = vpack.c.b16 %v2166, %v2165
        %v2210 = vpack.c.b16 %v2168, %v2167
        %v2211 = vpack.c.b16 %v2170, %v2169
        %v2212 = vpack.c.b16 %v2172, %v2171
        %v2213 = vpack.c.b16 %v2174, %v2173
        %v2214 = vpack.c.b16 %v2176, %v2175
        %v2215 = vpack.c.b16 %v2178, %v2177
        %v2216 = vpack.c.b16 %v2180, %v2179
        %v2217 = vpack.c.b16 %v2182, %v2181
        %v2218 = vpack.c.b16 %v2184, %v2183
        %v2219 = vpack.c.b16 %v2186, %v2185
        %v2220 = vpack.c.b16 %v2188, %v2187
        %v2221 = vpack.c.b16 %v2190, %v2189
        %v2222 = vpack.c.b16 %v2192, %v2191
        %v2223 = vpack.c.b16 %v2194, %v2193
        %v2224 = vpack.c.b16 %v2196, %v2195
        %v2225 = vpack.c.b16 %v2198, %v2197
        %v2226 = vpack.c.b16 %v2200, %v2199
        %v2227 = vpack.c.b16 %v2202, %v2201
        %v2228 = vpack.c.b16 %v2204, %v2203
        %2253 = vmatpush.bf16.msra.mxu0 %v2212
        %2254 = vmatpush.bf16.msra.mxu0 %v2211
        %2255 = vmatpush.bf16.msra.mxu0 %v2210
        %2256 = vmatpush.bf16.msra.mxu0 %v2209
        %2257 = vmatpush.bf16.msra.mxu0 %v2208
        %2258 = vmatpush.bf16.msra.mxu0 %v2207
        %2259 = vmatpush.bf16.msra.mxu0 %v2206
        %2260 = vmatpush.bf16.msra.mxu0 %v2205
        %2261 = vmatmul.bf16.gmra.mxu0 %v2096
        %v2262 = vpop.f32.mrf.mxu0
        %v2263 = vadd.f32 0.0, %v2262
        %v2264 = vpop.f32.mrf.mxu0
        %v2265 = vadd.f32 0.0, %v2264
        %2266 = vmatmul.bf16.gmra.mxu0 %v2095
        %v2267 = vpop.f32.mrf.mxu0
        %v2268 = vadd.f32 0.0, %v2267
        %v2269 = vpop.f32.mrf.mxu0
        %2270 = vdwg.mxu0
        %2271 = vmatpush.bf16.msra.mxu0 %v2220
        %2272 = vmatpush.bf16.msra.mxu0 %v2219
        %2273 = vmatpush.bf16.msra.mxu0 %v2218
        %2274 = vmatpush.bf16.msra.mxu0 %v2217
        %2275 = vmatpush.bf16.msra.mxu0 %v2216
        %2276 = vmatpush.bf16.msra.mxu0 %v2215
        %2277 = vmatpush.bf16.msra.mxu0 %v2214
        %2278 = vmatpush.bf16.msra.mxu0 %v2213
        %2279 = vmatmul.bf16.gmra.mxu0 %v2099
        %v2280 = vpop.f32.mrf.mxu0
        %v2281 = vadd.f32 %v2263, %v2280
        %v2282 = vpop.f32.mrf.mxu0
        %v2283 = vadd.f32 %v2265, %v2282
        %2284 = vmatmul.bf16.gmra.mxu0 %v2098
        %v2285 = vpop.f32.mrf.mxu0
        %v2286 = vadd.f32 %v2268, %v2285
        %v2287 = vpop.f32.mrf.mxu0
        %2288 = vdwg.mxu0
        %2289 = vmatpush.bf16.msra.mxu0 %v2228
        %2290 = vmatpush.bf16.msra.mxu0 %v2227
        %2291 = vmatpush.bf16.msra.mxu0 %v2226
        %2292 = vmatpush.bf16.msra.mxu0 %v2225
        %2293 = vmatpush.bf16.msra.mxu0 %v2224
        %2294 = vmatpush.bf16.msra.mxu0 %v2223
        %2295 = vmatpush.bf16.msra.mxu0 %v2222
        %2296 = vmatpush.bf16.msra.mxu0 %v2221
        %2297 = vmatmul.bf16.gmra.mxu0 %v2102
        %v2298 = vpop.f32.mrf.mxu0
        %v2299 = vadd.f32 %v2281, %v2298
        %v2300 = vpop.f32.mrf.mxu0
        %v2301 = vadd.f32 %v2283, %v2300
        %2302 = vmatmul.bf16.gmra.mxu0 %v2101
        %v2303 = vpop.f32.mrf.mxu0
        %v2304 = vadd.f32 %v2286, %v2303
        %v2305 = vpop.f32.mrf.mxu0
        %2306 = vdwg.mxu0
        %v2307 = vadd.f32 %v2023, %v2299
        %v2308 = vadd.f32 %v2025, %v2301
        %v2309 = vadd.f32 %v2028, %v2304
        %v2310 = vld [vmem:[%s6] sm:$0x1]
        %v2312 = vperm.slane %v2310, 0
        %v2314 = vadd.f32 %v2307, %v2312
        %v2315 = vadd.f32 %v2308, %v2312
        %v2316 = vadd.f32 %v2309, %v2312
        %2317 = vst [vmem:[%s312] sm:$0xff] %v2314
        %2318 = vst [vmem:[%s312 + $0x8] sm:$0xff] %v2315
        %2319 = vst [vmem:[%s312 + $0x10] sm:$0x1] %v2316
        %p2320 = scmp.lt.s32.totalorder %s20, 1
        %s2321 = scalar_select %p2320, %s20, 1
        %s2322 = smul.addr %s2321, 3
        %s2323 = smul.addr %s2322, 8
        %s2324 = scalar_lea.vmem %s7, %s2323
        // Predicated region
        $region57: #{tpu_custom_call.1} parent=47 // pred_check
          %p2325 = pneg %p190
        $region58: #{tpu_custom_call.1} parent=47 // pred_check_branch
          %2327 = sbr.rel (%p2325) target = $region60
        $region59: #{tpu_custom_call.1} parent=47 // pred_region
          _
        $region60: #{tpu_custom_call.1} parent=47 // pred_fallthru
          _
      $region48: #{tpu_custom_call.1} parent=5 // pred_fallthru
        _
      %p2328 = scmp.le.s32.totalorder 2, %s15
      // Predicated region
      $region61: #{tpu_custom_call.1} parent=5 // pred_check
        %p2329 = pneg %p2328
      $region62: #{tpu_custom_call.1} parent=5 // pred_check_branch
        %2331 = sbr.rel (%p2329) target = $region64
      $region63: #{tpu_custom_call.1} parent=5 // pred_region
        %s2332 = ssub.s32 %s15, 2
        // Predicated region
        $region65: #{tpu_custom_call.1} parent=63 // pred_check
          %p2333 = pneg %p196
        $region66: #{tpu_custom_call.1} parent=63 // pred_check_branch
          %2335 = sbr.rel (%p2333) target = $region68
        $region67: #{tpu_custom_call.1} parent=63 // pred_region
          %p2336 = scmp.lt.s32.totalorder %s21, 1
          %s2337 = scalar_select %p2336, %s21, 1
          %s2338 = smul.addr %s2337, 3
          %s2339 = smul.addr %s2338, 8
          %s2340 = scalar_lea.vmem %s7, %s2339
        $region68: #{tpu_custom_call.1} parent=63 // pred_fallthru
          _
      $region64: #{tpu_custom_call.1} parent=5 // pred_fallthru
        _
    $region6: #{tpu_custom_call.1} parent=1 // loop_footer
      %s19 = sadd.s32 1, %s15
    $region7: #{tpu_custom_call.1} parent=1 // loop_footer_branch
      %14 = sbr.rel target = $region3
    $region8: #{tpu_custom_call.1} parent=1 // loop_exit
      _
    %2341 = vsyncpa [#allocation3], 1
    %s2342 = scalar_lea.sflag [#allocation3], 1
    %2343 = vsyncpa %s2342, 1
    %2344 = vsyncpa [#allocation5], 1

</llo_original>
